<compile_context>
chip_gen: v7x
topology: tpu7x:2x2x1
jax: 0.10.0
libtpu: 0.0.40
codegen_flags: <defaults>
</compile_context>

<pallas_src>
import jax
import jax.numpy as jnp
from jax.experimental import pallas as pl
from jax.experimental.pallas import tpu as pltpu


# ----------------------------------------------------------------------------
# Fused bidirectional single-layer LSTM kernel.
#
# Inputs (all VMEM, full blocks, gridless call):
#   gx_f, gx_b : (T, B, 4H)  precomputed x @ W_ih^T + b_ih + b_hh per direction
#   wh_f, wh_b : (H, 4H)     recurrent weights (already transposed)
#   h0, c0     : (2, B, H)   initial states, [0]=forward, [1]=backward
#   [res_f, res_b : (T, B, H)]  optional residual added before the time max
# Outputs:
#   [seq_f, seq_b : (T, B, H)]  optional full hidden sequences (natural time)
#   pool_f, pool_b : (B, H)     max over time of (residual +) hidden
#   hT, cT         : (2, B, H)  final states (PyTorch h_n / c_n layout)
# Gate order follows PyTorch: i, f, g, o.
# ----------------------------------------------------------------------------
def make_bilstm_kernel(T, H, write_seq, with_residual):
    def kernel(*refs):
        gxf, gxb, whf, whb, h0, c0 = refs[:6]
        pos = 6
        if with_residual:
            resf, resb = refs[pos], refs[pos + 1]
            pos += 2
        if write_seq:
            seqf, seqb = refs[pos], refs[pos + 1]
            pos += 2
        poolf, poolb, hT, cT = refs[pos:pos + 4]

        # State lives directly in the (VMEM-resident) output refs.
        hT[...] = h0[...]
        cT[...] = c0[...]
        poolf[...] = jnp.full_like(poolf, -jnp.inf)
        poolb[...] = jnp.full_like(poolb, -jnp.inf)

        @pl.loop(0, T)
        def _(t):
            tb = T - 1 - t  # time index processed by the backward direction

            def cell(gates, c_prev):
                # Activations over the full (B, 4H) tile, then slice.
                sig = jax.nn.sigmoid(gates)
                tg = jnp.tanh(gates)
                i_g = sig[:, 0:H]
                f_g = sig[:, H:2 * H]
                g_g = tg[:, 2 * H:3 * H]
                o_g = sig[:, 3 * H:4 * H]
                c_new = f_g * c_prev + i_g * g_g
                h_new = o_g * jnp.tanh(c_new)
                return h_new, c_new

            gates_f = gxf[t] + jnp.dot(hT[0], whf[...],
                                       preferred_element_type=jnp.float32)
            gates_b = gxb[tb] + jnp.dot(hT[1], whb[...],
                                        preferred_element_type=jnp.float32)
            h_f, c_f = cell(gates_f, cT[0])
            h_b, c_b = cell(gates_b, cT[1])

            hT[0] = h_f
            cT[0] = c_f
            hT[1] = h_b
            cT[1] = c_b

            if write_seq:
                seqf[t] = h_f
                seqb[tb] = h_b

            if with_residual:
                poolf[...] = jnp.maximum(poolf[...], resf[t] + h_f)
                poolb[...] = jnp.maximum(poolb[...], resb[tb] + h_b)
            else:
                poolf[...] = jnp.maximum(poolf[...], h_f)
                poolb[...] = jnp.maximum(poolb[...], h_b)

    return kernel


def bilstm_fused(gx_f, gx_b, wh_f, wh_b, h0, c0,
                 res_f=None, res_b=None, write_seq=True):
    """One bidirectional LSTM layer as a single gridless pallas_call."""
    T, B, G = gx_f.shape
    H = G // 4
    with_residual = res_f is not None

    inputs = [gx_f, gx_b, wh_f, wh_b, h0, c0]
    if with_residual:
        inputs += [res_f, res_b]

    out_shapes = []
    if write_seq:
        out_shapes += [jax.ShapeDtypeStruct((T, B, H), jnp.float32)] * 2
    out_shapes += [jax.ShapeDtypeStruct((B, H), jnp.float32)] * 2      # pools
    out_shapes += [jax.ShapeDtypeStruct((2, B, H), jnp.float32)] * 2   # hT, cT

    outs = pl.pallas_call(
        make_bilstm_kernel(T, H, write_seq, with_residual),
        out_shape=tuple(out_shapes),
        compiler_params=pltpu.CompilerParams(
            vmem_limit_bytes=32 * 1024 * 1024),
    )(*inputs)

    outs = list(outs)
    res = {}
    if write_seq:
        res['seq_f'] = outs.pop(0)
        res['seq_b'] = outs.pop(0)
    res['pool_f'] = outs.pop(0)
    res['pool_b'] = outs.pop(0)
    res['hT'] = outs.pop(0)
    res['cT'] = outs.pop(0)
    return res


# ----------------------------------------------------------------------------
# Input-projection helpers (hoisted out of the recurrence, plain XLA matmuls).
# ----------------------------------------------------------------------------
def input_gates(x, w_ih, b_ih, b_hh):
    """x: (T, B, I), w_ih: (4H, I)  ->  (T, B, 4H)"""
    T, B, I = x.shape
    G = w_ih.shape[0]
    gx = jnp.dot(x.reshape(T * B, I), w_ih.T,
                 preferred_element_type=jnp.float32) + (b_ih + b_hh)
    return gx.reshape(T, B, G)


def input_gates_split(xf, xb, w_ih, b_ih, b_hh):
    """Layer-2 input projection on split (fwd, bwd) features (never concat).

    xf, xb: (T, B, H);  w_ih: (4H, 2H)  ->  (T, B, 4H)
    """
    T, B, H = xf.shape
    G = w_ih.shape[0]
    wt = w_ih.T                        # (2H, 4H)
    gx = (jnp.dot(xf.reshape(T * B, H), wt[:H],
                  preferred_element_type=jnp.float32)
          + jnp.dot(xb.reshape(T * B, H), wt[H:],
                    preferred_element_type=jnp.float32)
          + (b_ih + b_hh))
    return gx.reshape(T, B, G)


# ----------------------------------------------------------------------------
# Final kernel: combine relation-side maxes + cosine similarity.
# ----------------------------------------------------------------------------
def _cosine_kernel(qf_ref, qb_ref, wf_ref, wb_ref, rf_ref, rb_ref, out_ref):
    qf = qf_ref[...]
    qb = qb_ref[...]
    # max over the time-concatenated relation sequences == elementwise max of
    # the two per-sequence time maxes.
    rel_f = jnp.maximum(wf_ref[...], rf_ref[...])
    rel_b = jnp.maximum(wb_ref[...], rb_ref[...])
    dot = jnp.sum(qf * rel_f + qb * rel_b, axis=1, keepdims=True)
    qn2 = jnp.sum(qf * qf + qb * qb, axis=1, keepdims=True)
    rn2 = jnp.sum(rel_f * rel_f + rel_b * rel_b, axis=1, keepdims=True)
    denom = jnp.maximum(jnp.sqrt(qn2 * rn2), jnp.float32(1e-8))
    out_ref[...] = dot / denom


def cosine_pallas(qf, qb, wf, wb, rf, rb):
    B = qf.shape[0]
    out = pl.pallas_call(
        _cosine_kernel,
        out_shape=jax.ShapeDtypeStruct((B, 1), jnp.float32),
    )(qf, qb, wf, wb, rf, rb)
    return out[:, 0]


# ----------------------------------------------------------------------------
# Full HR_BiLSTM forward (mirrors the PyTorch module, eval mode).
# ----------------------------------------------------------------------------
def _forward(params, question, rela_relation, word_relation):
    # (B, T) token ids -> time-major (T, B), then embed.
    q_ids = question.T
    rr_ids = rela_relation.T
    wr_ids = word_relation.T
    q_e = params['word_emb'][q_ids]            # (Tq, B, E)
    rr_e = params['rela_emb'][rr_ids]          # (Tr, B, E)
    wr_e = params['word_emb'][wr_ids]          # (Tw, B, E)
    # TODO(synk): nn.Dropout omitted (inference-mode identity).

    B = q_ids.shape[1]
    p1 = params['bilstm_1']
    p2 = params['bilstm_2']
    H = p1['w_hh_f'].shape[1]
    zeros2 = jnp.zeros((2, B, H), jnp.float32)

    wh1_f, wh1_b = p1['w_hh_f'].T, p1['w_hh_b'].T
    wh2_f, wh2_b = p2['w_hh_f'].T, p2['w_hh_b'].T

    # ---- question path ------------------------------------------------------
    gq_f = input_gates(q_e, p1['w_ih_f'], p1['b_ih_f'], p1['b_hh_f'])
    gq_b = input_gates(q_e, p1['w_ih_b'], p1['b_ih_b'], p1['b_hh_b'])
    q1 = bilstm_fused(gq_f, gq_b, wh1_f, wh1_b, zeros2, zeros2,
                      write_seq=True)
    q1_f, q1_b = q1['seq_f'], q1['seq_b']      # question_out_1 split by dir

    gq2_f = input_gates_split(q1_f, q1_b, p2['w_ih_f'],
                              p2['b_ih_f'], p2['b_hh_f'])
    gq2_b = input_gates_split(q1_f, q1_b, p2['w_ih_b'],
                              p2['b_ih_b'], p2['b_hh_b'])
    # Residual (question_out_1) + running max fused into the second LSTM.
    q2 = bilstm_fused(gq2_f, gq2_b, wh2_f, wh2_b, zeros2, zeros2,
                      res_f=q1_f, res_b=q1_b, write_seq=False)
    q_rep_f, q_rep_b = q2['pool_f'], q2['pool_b']

    # ---- relation path ------------------------------------------------------
    gw_f = input_gates(wr_e, p1['w_ih_f'], p1['b_ih_f'], p1['b_hh_f'])
    gw_b = input_gates(wr_e, p1['w_ih_b'], p1['b_ih_b'], p1['b_hh_b'])
    w_out = bilstm_fused(gw_f, gw_b, wh1_f, wh1_b, zeros2, zeros2,
                         write_seq=False)

    gr_f = input_gates(rr_e, p1['w_ih_f'], p1['b_ih_f'], p1['b_hh_f'])
    gr_b = input_gates(rr_e, p1['w_ih_b'], p1['b_ih_b'], p1['b_hh_b'])
    r_out = bilstm_fused(gr_f, gr_b, wh1_f, wh1_b,
                         w_out['hT'], w_out['cT'], write_seq=False)

    # ---- relation max combine + cosine similarity ---------------------------
    return cosine_pallas(q_rep_f, q_rep_b,
                         w_out['pool_f'], w_out['pool_b'],
                         r_out['pool_f'], r_out['pool_b'])


hr_bilstm_forward = jax.jit(_forward)


# ----------------------------------------------------------------------------
# Deterministic parameter construction (PyTorch nn.LSTM-style init).
# ----------------------------------------------------------------------------
def init_bilstm_params(key, input_size, hidden_size):
    bound = 1.0 / (hidden_size ** 0.5)
    p = {}
    for d in ('f', 'b'):
        key, k1, k2, k3, k4 = jax.random.split(key, 5)
        p[f'w_ih_{d}'] = jax.random.uniform(
            k1, (4 * hidden_size, input_size), jnp.float32, -bound, bound)
        p[f'w_hh_{d}'] = jax.random.uniform(
            k2, (4 * hidden_size, hidden_size), jnp.float32, -bound, bound)
        p[f'b_ih_{d}'] = jax.random.uniform(
            k3, (4 * hidden_size,), jnp.float32, -bound, bound)
        p[f'b_hh_{d}'] = jax.random.uniform(
            k4, (4 * hidden_size,), jnp.float32, -bound, bound)
    return p, key


def build_params(key, *, word_vocab, rela_vocab, emb_size, hidden_size):
    key, kw, kr = jax.random.split(key, 3)
    word_emb = jax.random.normal(kw, (word_vocab, emb_size), jnp.float32)
    rela_emb = jax.random.normal(kr, (rela_vocab, emb_size), jnp.float32)
    bilstm_1, key = init_bilstm_params(key, emb_size, hidden_size)
    bilstm_2, key = init_bilstm_params(key, 2 * hidden_size, hidden_size)
    return {'word_emb': word_emb, 'rela_emb': rela_emb,
            'bilstm_1': bilstm_1, 'bilstm_2': bilstm_2}


if __name__ == "__main__":
    B = 2                 # batch
    Tq, Tr, Tw = 8, 4, 6  # question / rela_relation / word_relation lengths
    E = 32                # embedding size
    H = 32                # hidden size
    WV, RV = 20, 10       # word / relation vocab sizes

    params = build_params(jax.random.PRNGKey(0), word_vocab=WV, rela_vocab=RV,
                          emb_size=E, hidden_size=H)

    kq, kr, kw = jax.random.split(jax.random.PRNGKey(0), 3)
    question = jax.random.randint(kq, (B, Tq), 0, WV, dtype=jnp.int32)
    rela_relation = jax.random.randint(kr, (B, Tr), 0, RV, dtype=jnp.int32)
    word_relation = jax.random.randint(kw, (B, Tw), 0, WV, dtype=jnp.int32)

    score = hr_bilstm_forward(params, question, rela_relation, word_relation)
    score = jax.block_until_ready(score)
    assert score.shape == (B,)
    print("KERNEL_OK")
</pallas_src>

<mosaic_0001>
module attributes {stable_mosaic.version = 11 : i64} {
  func.func @kernel(%arg0: memref<8x2x128xf32, #tpu.memory_space<vmem>>, %arg1: memref<8x2x128xf32, #tpu.memory_space<vmem>>, %arg2: memref<32x128xf32, #tpu.memory_space<vmem>>, %arg3: memref<32x128xf32, #tpu.memory_space<vmem>>, %arg4: memref<2x2x32xf32, #tpu.memory_space<vmem>>, %arg5: memref<2x2x32xf32, #tpu.memory_space<vmem>>, %arg6: memref<8x2x32xf32, #tpu.memory_space<vmem>>, %arg7: memref<8x2x32xf32, #tpu.memory_space<vmem>>, %arg8: memref<2x32xf32, #tpu.memory_space<vmem>>, %arg9: memref<2x32xf32, #tpu.memory_space<vmem>>, %arg10: memref<2x2x32xf32, #tpu.memory_space<vmem>>, %arg11: memref<2x2x32xf32, #tpu.memory_space<vmem>>) attributes {dimension_semantics = [], scalar_prefetch = 0 : i64, scratch_operands = 0 : i64, tpu.core_type = #tpu.core_type<tc>} {
    %c0 = arith.constant 0 : index
    %c0_0 = arith.constant 0 : index
    %c0_1 = arith.constant 0 : index
    %0 = vector.load %arg4[%c0, %c0_0, %c0_1] : memref<2x2x32xf32, #tpu.memory_space<vmem>>, vector<2x2x32xf32>
    %c0_2 = arith.constant 0 : index
    %c0_3 = arith.constant 0 : index
    %c0_4 = arith.constant 0 : index
    %1 = vector.load %arg10[%c0_2, %c0_3, %c0_4] : memref<2x2x32xf32, #tpu.memory_space<vmem>>, vector<2x2x32xf32>
    tpu.vector_store %arg10[%c0_2, %c0_3, %c0_4], %0 {strides = array<i32>} : memref<2x2x32xf32, #tpu.memory_space<vmem>>, vector<2x2x32xf32>,
    %c0_5 = arith.constant 0 : index
    %c0_6 = arith.constant 0 : index
    %c0_7 = arith.constant 0 : index
    %2 = vector.load %arg5[%c0_5, %c0_6, %c0_7] : memref<2x2x32xf32, #tpu.memory_space<vmem>>, vector<2x2x32xf32>
    %c0_8 = arith.constant 0 : index
    %c0_9 = arith.constant 0 : index
    %c0_10 = arith.constant 0 : index
    %3 = vector.load %arg11[%c0_8, %c0_9, %c0_10] : memref<2x2x32xf32, #tpu.memory_space<vmem>>, vector<2x2x32xf32>
    tpu.vector_store %arg11[%c0_8, %c0_9, %c0_10], %2 {strides = array<i32>} : memref<2x2x32xf32, #tpu.memory_space<vmem>>, vector<2x2x32xf32>,
    %cst = arith.constant 0xFF800000 : f32
    %4 = vector.broadcast %cst : f32 to vector<2x32xf32>
    %c0_11 = arith.constant 0 : index
    %c0_12 = arith.constant 0 : index
    %5 = vector.load %arg8[%c0_11, %c0_12] : memref<2x32xf32, #tpu.memory_space<vmem>>, vector<2x32xf32>
    tpu.vector_store %arg8[%c0_11, %c0_12], %4 {strides = array<i32>} : memref<2x32xf32, #tpu.memory_space<vmem>>, vector<2x32xf32>,
    %cst_13 = arith.constant 0xFF800000 : f32
    %6 = vector.broadcast %cst_13 : f32 to vector<2x32xf32>
    %c0_14 = arith.constant 0 : index
    %c0_15 = arith.constant 0 : index
    %7 = vector.load %arg9[%c0_14, %c0_15] : memref<2x32xf32, #tpu.memory_space<vmem>>, vector<2x32xf32>
    tpu.vector_store %arg9[%c0_14, %c0_15], %6 {strides = array<i32>} : memref<2x32xf32, #tpu.memory_space<vmem>>, vector<2x32xf32>,
    %c0_i32 = arith.constant 0 : i32
    %c8_i32 = arith.constant 8 : i32
    %8 = arith.addi %c0_i32, %c8_i32 : i32
    %c1_i32 = arith.constant 1 : i32
    scf.for %arg12 = %c0_i32 to %8 step %c1_i32  : i32 {
      %c1_i32_17 = arith.constant 1 : i32
      %9 = arith.muli %arg12, %c1_i32_17 : i32
      %c0_i32_18 = arith.constant 0 : i32
      %10 = arith.addi %c0_i32_18, %9 : i32
      %c7_i32 = arith.constant 7 : i32
      %11 = arith.subi %c7_i32, %10 : i32
      %12 = arith.index_cast %10 : i32 to index
      %c0_19 = arith.constant 0 : index
      %c0_20 = arith.constant 0 : index
      %13 = vector.load %arg0[%12, %c0_19, %c0_20] : memref<8x2x128xf32, #tpu.memory_space<vmem>>, vector<1x2x128xf32>
      %14 = vector.shape_cast %13 : vector<1x2x128xf32> to vector<2x128xf32>
      %c0_21 = arith.constant 0 : index
      %c0_22 = arith.constant 0 : index
      %c0_23 = arith.constant 0 : index
      %15 = vector.load %arg10[%c0_21, %c0_22, %c0_23] : memref<2x2x32xf32, #tpu.memory_space<vmem>>, vector<1x2x32xf32>
      %16 = vector.shape_cast %15 : vector<1x2x32xf32> to vector<2x32xf32>
      %c0_24 = arith.constant 0 : index
      %c0_25 = arith.constant 0 : index
      %17 = vector.load %arg2[%c0_24, %c0_25] : memref<32x128xf32, #tpu.memory_space<vmem>>, vector<32x128xf32>
      %cst_26 = arith.constant dense<0.000000e+00> : vector<2x128xf32>
      %18 = tpu.matmul %16, %17, %cst_26 {dimension_numbers = #tpu.dot_dimension_numbers<[1], [0], [0], [1], [0, 0, 1, 1], [], []>} : vector<2x32xf32>, vector<32x128xf32>, vector<2x128xf32> -> vector<2x128xf32>
      %19 = arith.addf %14, %18 : vector<2x128xf32>
      %20 = arith.index_cast %11 : i32 to index
      %c0_27 = arith.constant 0 : index
      %c0_28 = arith.constant 0 : index
      %21 = vector.load %arg1[%20, %c0_27, %c0_28] : memref<8x2x128xf32, #tpu.memory_space<vmem>>, vector<1x2x128xf32>
      %22 = vector.shape_cast %21 : vector<1x2x128xf32> to vector<2x128xf32>
      %c1 = arith.constant 1 : index
      %c0_29 = arith.constant 0 : index
      %c0_30 = arith.constant 0 : index
      %23 = vector.load %arg10[%c1, %c0_29, %c0_30] : memref<2x2x32xf32, #tpu.memory_space<vmem>>, vector<1x2x32xf32>
      %24 = vector.shape_cast %23 : vector<1x2x32xf32> to vector<2x32xf32>
      %c0_31 = arith.constant 0 : index
      %c0_32 = arith.constant 0 : index
      %25 = vector.load %arg3[%c0_31, %c0_32] : memref<32x128xf32, #tpu.memory_space<vmem>>, vector<32x128xf32>
      %cst_33 = arith.constant dense<0.000000e+00> : vector<2x128xf32>
      %26 = tpu.matmul %24, %25, %cst_33 {dimension_numbers = #tpu.dot_dimension_numbers<[1], [0], [0], [1], [0, 0, 1, 1], [], []>} : vector<2x32xf32>, vector<32x128xf32>, vector<2x128xf32> -> vector<2x128xf32>
      %27 = arith.addf %22, %26 : vector<2x128xf32>
      %c0_34 = arith.constant 0 : index
      %c0_35 = arith.constant 0 : index
      %c0_36 = arith.constant 0 : index
      %28 = vector.load %arg11[%c0_34, %c0_35, %c0_36] : memref<2x2x32xf32, #tpu.memory_space<vmem>>, vector<1x2x32xf32>
      %29 = vector.shape_cast %28 : vector<1x2x32xf32> to vector<2x32xf32>
      %30 = arith.negf %19 : vector<2x128xf32>
      %31 = math.exp %30 : vector<2x128xf32>
      %cst_37 = arith.constant 1.000000e+00 : f32
      %32 = vector.broadcast %cst_37 : f32 to vector<2x128xf32>
      %33 = arith.addf %32, %31 : vector<2x128xf32>
      %34 = arith.divf %32, %33 : vector<2x128xf32>
      %35 = math.tanh %19 : vector<2x128xf32>
      %36 = vector.extract_strided_slice %34 {offsets = [0, 0], sizes = [2, 32], strides = [1, 1]} : vector<2x128xf32> to vector<2x32xf32>
      %37 = vector.extract_strided_slice %34 {offsets = [0, 32], sizes = [2, 32], strides = [1, 1]} : vector<2x128xf32> to vector<2x32xf32>
      %38 = vector.extract_strided_slice %35 {offsets = [0, 64], sizes = [2, 32], strides = [1, 1]} : vector<2x128xf32> to vector<2x32xf32>
      %39 = vector.extract_strided_slice %34 {offsets = [0, 96], sizes = [2, 32], strides = [1, 1]} : vector<2x128xf32> to vector<2x32xf32>
      %40 = arith.mulf %37, %29 : vector<2x32xf32>
      %41 = arith.mulf %36, %38 : vector<2x32xf32>
      %42 = arith.addf %40, %41 : vector<2x32xf32>
      %43 = math.tanh %42 : vector<2x32xf32>
      %44 = arith.mulf %39, %43 : vector<2x32xf32>
      %c1_38 = arith.constant 1 : index
      %c0_39 = arith.constant 0 : index
      %c0_40 = arith.constant 0 : index
      %45 = vector.load %arg11[%c1_38, %c0_39, %c0_40] : memref<2x2x32xf32, #tpu.memory_space<vmem>>, vector<1x2x32xf32>
      %46 = vector.shape_cast %45 : vector<1x2x32xf32> to vector<2x32xf32>
      %47 = arith.negf %27 : vector<2x128xf32>
      %48 = math.exp %47 : vector<2x128xf32>
      %cst_41 = arith.constant 1.000000e+00 : f32
      %49 = vector.broadcast %cst_41 : f32 to vector<2x128xf32>
      %50 = arith.addf %49, %48 : vector<2x128xf32>
      %51 = arith.divf %49, %50 : vector<2x128xf32>
      %52 = math.tanh %27 : vector<2x128xf32>
      %53 = vector.extract_strided_slice %51 {offsets = [0, 0], sizes = [2, 32], strides = [1, 1]} : vector<2x128xf32> to vector<2x32xf32>
      %54 = vector.extract_strided_slice %51 {offsets = [0, 32], sizes = [2, 32], strides = [1, 1]} : vector<2x128xf32> to vector<2x32xf32>
      %55 = vector.extract_strided_slice %52 {offsets = [0, 64], sizes = [2, 32], strides = [1, 1]} : vector<2x128xf32> to vector<2x32xf32>
      %56 = vector.extract_strided_slice %51 {offsets = [0, 96], sizes = [2, 32], strides = [1, 1]} : vector<2x128xf32> to vector<2x32xf32>
      %57 = arith.mulf %54, %46 : vector<2x32xf32>
      %58 = arith.mulf %53, %55 : vector<2x32xf32>
      %59 = arith.addf %57, %58 : vector<2x32xf32>
      %60 = math.tanh %59 : vector<2x32xf32>
      %61 = arith.mulf %56, %60 : vector<2x32xf32>
      %c0_42 = arith.constant 0 : index
      %c0_43 = arith.constant 0 : index
      %c0_44 = arith.constant 0 : index
      %62 = vector.load %arg10[%c0_42, %c0_43, %c0_44] : memref<2x2x32xf32, #tpu.memory_space<vmem>>, vector<1x2x32xf32>
      %63 = vector.shape_cast %62 : vector<1x2x32xf32> to vector<2x32xf32>
      %64 = vector.shape_cast %44 : vector<2x32xf32> to vector<1x2x32xf32>
      tpu.vector_store %arg10[%c0_42, %c0_43, %c0_44], %64 {strides = array<i32>} : memref<2x2x32xf32, #tpu.memory_space<vmem>>, vector<1x2x32xf32>,
      %c0_45 = arith.constant 0 : index
      %c0_46 = arith.constant 0 : index
      %c0_47 = arith.constant 0 : index
      %65 = vector.load %arg11[%c0_45, %c0_46, %c0_47] : memref<2x2x32xf32, #tpu.memory_space<vmem>>, vector<1x2x32xf32>
      %66 = vector.shape_cast %65 : vector<1x2x32xf32> to vector<2x32xf32>
      %67 = vector.shape_cast %42 : vector<2x32xf32> to vector<1x2x32xf32>
      tpu.vector_store %arg11[%c0_45, %c0_46, %c0_47], %67 {strides = array<i32>} : memref<2x2x32xf32, #tpu.memory_space<vmem>>, vector<1x2x32xf32>,
      %c1_48 = arith.constant 1 : index
      %c0_49 = arith.constant 0 : index
      %c0_50 = arith.constant 0 : index
      %68 = vector.load %arg10[%c1_48, %c0_49, %c0_50] : memref<2x2x32xf32, #tpu.memory_space<vmem>>, vector<1x2x32xf32>
      %69 = vector.shape_cast %68 : vector<1x2x32xf32> to vector<2x32xf32>
      %70 = vector.shape_cast %61 : vector<2x32xf32> to vector<1x2x32xf32>
      tpu.vector_store %arg10[%c1_48, %c0_49, %c0_50], %70 {strides = array<i32>} : memref<2x2x32xf32, #tpu.memory_space<vmem>>, vector<1x2x32xf32>,
      %c1_51 = arith.constant 1 : index
      %c0_52 = arith.constant 0 : index
      %c0_53 = arith.constant 0 : index
      %71 = vector.load %arg11[%c1_51, %c0_52, %c0_53] : memref<2x2x32xf32, #tpu.memory_space<vmem>>, vector<1x2x32xf32>
      %72 = vector.shape_cast %71 : vector<1x2x32xf32> to vector<2x32xf32>
      %73 = vector.shape_cast %59 : vector<2x32xf32> to vector<1x2x32xf32>
      tpu.vector_store %arg11[%c1_51, %c0_52, %c0_53], %73 {strides = array<i32>} : memref<2x2x32xf32, #tpu.memory_space<vmem>>, vector<1x2x32xf32>,
      %74 = arith.index_cast %10 : i32 to index
      %c0_54 = arith.constant 0 : index
      %c0_55 = arith.constant 0 : index
      %75 = vector.load %arg6[%74, %c0_54, %c0_55] : memref<8x2x32xf32, #tpu.memory_space<vmem>>, vector<1x2x32xf32>
      %76 = vector.shape_cast %75 : vector<1x2x32xf32> to vector<2x32xf32>
      %77 = vector.shape_cast %44 : vector<2x32xf32> to vector<1x2x32xf32>
      tpu.vector_store %arg6[%74, %c0_54, %c0_55], %77 {strides = array<i32>} : memref<8x2x32xf32, #tpu.memory_space<vmem>>, vector<1x2x32xf32>,
      %78 = arith.index_cast %11 : i32 to index
      %c0_56 = arith.constant 0 : index
      %c0_57 = arith.constant 0 : index
      %79 = vector.load %arg7[%78, %c0_56, %c0_57] : memref<8x2x32xf32, #tpu.memory_space<vmem>>, vector<1x2x32xf32>
      %80 = vector.shape_cast %79 : vector<1x2x32xf32> to vector<2x32xf32>
      %81 = vector.shape_cast %61 : vector<2x32xf32> to vector<1x2x32xf32>
      tpu.vector_store %arg7[%78, %c0_56, %c0_57], %81 {strides = array<i32>} : memref<8x2x32xf32, #tpu.memory_space<vmem>>, vector<1x2x32xf32>,
      %c0_58 = arith.constant 0 : index
      %c0_59 = arith.constant 0 : index
      %82 = vector.load %arg8[%c0_58, %c0_59] : memref<2x32xf32, #tpu.memory_space<vmem>>, vector<2x32xf32>
      %83 = arith.maximumf %82, %44 : vector<2x32xf32>
      %c0_60 = arith.constant 0 : index
      %c0_61 = arith.constant 0 : index
      %84 = vector.load %arg8[%c0_60, %c0_61] : memref<2x32xf32, #tpu.memory_space<vmem>>, vector<2x32xf32>
      tpu.vector_store %arg8[%c0_60, %c0_61], %83 {strides = array<i32>} : memref<2x32xf32, #tpu.memory_space<vmem>>, vector<2x32xf32>,
      %c0_62 = arith.constant 0 : index
      %c0_63 = arith.constant 0 : index
      %85 = vector.load %arg9[%c0_62, %c0_63] : memref<2x32xf32, #tpu.memory_space<vmem>>, vector<2x32xf32>
      %86 = arith.maximumf %85, %61 : vector<2x32xf32>
      %c0_64 = arith.constant 0 : index
      %c0_65 = arith.constant 0 : index
      %87 = vector.load %arg9[%c0_64, %c0_65] : memref<2x32xf32, #tpu.memory_space<vmem>>, vector<2x32xf32>
      tpu.vector_store %arg9[%c0_64, %c0_65], %86 {strides = array<i32>} : memref<2x32xf32, #tpu.memory_space<vmem>>, vector<2x32xf32>,
    }
    %c8_i32_16 = arith.constant 8 : i32
    return
  }
}

module attributes {stable_mosaic.version = 11 : i64} {
  func.func @kernel(%arg0: memref<8x2x128xf32, #tpu.memory_space<vmem>>, %arg1: memref<8x2x128xf32, #tpu.memory_space<vmem>>, %arg2: memref<32x128xf32, #tpu.memory_space<vmem>>, %arg3: memref<32x128xf32, #tpu.memory_space<vmem>>, %arg4: memref<2x2x32xf32, #tpu.memory_space<vmem>>, %arg5: memref<2x2x32xf32, #tpu.memory_space<vmem>>, %arg6: memref<8x2x32xf32, #tpu.memory_space<vmem>>, %arg7: memref<8x2x32xf32, #tpu.memory_space<vmem>>, %arg8: memref<2x32xf32, #tpu.memory_space<vmem>>, %arg9: memref<2x32xf32, #tpu.memory_space<vmem>>, %arg10: memref<2x2x32xf32, #tpu.memory_space<vmem>>, %arg11: memref<2x2x32xf32, #tpu.memory_space<vmem>>) attributes {dimension_semantics = [], scalar_prefetch = 0 : i64, scratch_operands = 0 : i64, tpu.core_type = #tpu.core_type<tc>} {
    %c0 = arith.constant 0 : index
    %c0_0 = arith.constant 0 : index
    %c0_1 = arith.constant 0 : index
    %0 = vector.load %arg4[%c0, %c0_0, %c0_1] : memref<2x2x32xf32, #tpu.memory_space<vmem>>, vector<2x2x32xf32>
    %c0_2 = arith.constant 0 : index
    %c0_3 = arith.constant 0 : index
    %c0_4 = arith.constant 0 : index
    %1 = vector.load %arg10[%c0_2, %c0_3, %c0_4] : memref<2x2x32xf32, #tpu.memory_space<vmem>>, vector<2x2x32xf32>
    tpu.vector_store %arg10[%c0_2, %c0_3, %c0_4], %0 {strides = array<i32>} : memref<2x2x32xf32, #tpu.memory_space<vmem>>, vector<2x2x32xf32>,
    %c0_5 = arith.constant 0 : index
    %c0_6 = arith.constant 0 : index
    %c0_7 = arith.constant 0 : index
    %2 = vector.load %arg5[%c0_5, %c0_6, %c0_7] : memref<2x2x32xf32, #tpu.memory_space<vmem>>, vector<2x2x32xf32>
    %c0_8 = arith.constant 0 : index
    %c0_9 = arith.constant 0 : index
    %c0_10 = arith.constant 0 : index
    %3 = vector.load %arg11[%c0_8, %c0_9, %c0_10] : memref<2x2x32xf32, #tpu.memory_space<vmem>>, vector<2x2x32xf32>
    tpu.vector_store %arg11[%c0_8, %c0_9, %c0_10], %2 {strides = array<i32>} : memref<2x2x32xf32, #tpu.memory_space<vmem>>, vector<2x2x32xf32>,
    %cst = arith.constant 0xFF800000 : f32
    %4 = vector.broadcast %cst : f32 to vector<2x32xf32>
    %c0_11 = arith.constant 0 : index
    %c0_12 = arith.constant 0 : index
    %5 = vector.load %arg8[%c0_11, %c0_12] : memref<2x32xf32, #tpu.memory_space<vmem>>, vector<2x32xf32>
    tpu.vector_store %arg8[%c0_11, %c0_12], %4 {strides = array<i32>} : memref<2x32xf32, #tpu.memory_space<vmem>>, vector<2x32xf32>,
    %cst_13 = arith.constant 0xFF800000 : f32
    %6 = vector.broadcast %cst_13 : f32 to vector<2x32xf32>
    %c0_14 = arith.constant 0 : index
    %c0_15 = arith.constant 0 : index
    %7 = vector.load %arg9[%c0_14, %c0_15] : memref<2x32xf32, #tpu.memory_space<vmem>>, vector<2x32xf32>
    tpu.vector_store %arg9[%c0_14, %c0_15], %6 {strides = array<i32>} : memref<2x32xf32, #tpu.memory_space<vmem>>, vector<2x32xf32>,
    %c0_i32 = arith.constant 0 : i32
    %c8_i32 = arith.constant 8 : i32
    %8 = arith.addi %c0_i32, %c8_i32 : i32
    %c1_i32 = arith.constant 1 : i32
    scf.for %arg12 = %c0_i32 to %8 step %c1_i32  : i32 {
      %c1_i32_17 = arith.constant 1 : i32
      %9 = arith.muli %arg12, %c1_i32_17 : i32
      %c0_i32_18 = arith.constant 0 : i32
      %10 = arith.addi %c0_i32_18, %9 : i32
      %c7_i32 = arith.constant 7 : i32
      %11 = arith.subi %c7_i32, %10 : i32
      %12 = arith.index_cast %10 : i32 to index
      %c0_19 = arith.constant 0 : index
      %c0_20 = arith.constant 0 : index
      %13 = vector.load %arg0[%12, %c0_19, %c0_20] : memref<8x2x128xf32, #tpu.memory_space<vmem>>, vector<1x2x128xf32>
      %14 = vector.shape_cast %13 : vector<1x2x128xf32> to vector<2x128xf32>
      %c0_21 = arith.constant 0 : index
      %c0_22 = arith.constant 0 : index
      %c0_23 = arith.constant 0 : index
      %15 = vector.load %arg10[%c0_21, %c0_22, %c0_23] : memref<2x2x32xf32, #tpu.memory_space<vmem>>, vector<1x2x32xf32>
      %16 = vector.shape_cast %15 : vector<1x2x32xf32> to vector<2x32xf32>
      %c0_24 = arith.constant 0 : index
      %c0_25 = arith.constant 0 : index
      %17 = vector.load %arg2[%c0_24, %c0_25] : memref<32x128xf32, #tpu.memory_space<vmem>>, vector<32x128xf32>
      %cst_26 = arith.constant dense<0.000000e+00> : vector<2x128xf32>
      %18 = tpu.matmul %16, %17, %cst_26 {dimension_numbers = #tpu.dot_dimension_numbers<[1], [0], [0], [1], [0, 0, 1, 1], [], []>} : vector<2x32xf32>, vector<32x128xf32>, vector<2x128xf32> -> vector<2x128xf32>
      %19 = arith.addf %14, %18 : vector<2x128xf32>
      %20 = arith.index_cast %11 : i32 to index
      %c0_27 = arith.constant 0 : index
      %c0_28 = arith.constant 0 : index
      %21 = vector.load %arg1[%20, %c0_27, %c0_28] : memref<8x2x128xf32, #tpu.memory_space<vmem>>, vector<1x2x128xf32>
      %22 = vector.shape_cast %21 : vector<1x2x128xf32> to vector<2x128xf32>
      %c1 = arith.constant 1 : index
      %c0_29 = arith.constant 0 : index
      %c0_30 = arith.constant 0 : index
      %23 = vector.load %arg10[%c1, %c0_29, %c0_30] : memref<2x2x32xf32, #tpu.memory_space<vmem>>, vector<1x2x32xf32>
      %24 = vector.shape_cast %23 : vector<1x2x32xf32> to vector<2x32xf32>
      %c0_31 = arith.constant 0 : index
      %c0_32 = arith.constant 0 : index
      %25 = vector.load %arg3[%c0_31, %c0_32] : memref<32x128xf32, #tpu.memory_space<vmem>>, vector<32x128xf32>
      %cst_33 = arith.constant dense<0.000000e+00> : vector<2x128xf32>
      %26 = tpu.matmul %24, %25, %cst_33 {dimension_numbers = #tpu.dot_dimension_numbers<[1], [0], [0], [1], [0, 0, 1, 1], [], []>} : vector<2x32xf32>, vector<32x128xf32>, vector<2x128xf32> -> vector<2x128xf32>
      %27 = arith.addf %22, %26 : vector<2x128xf32>
      %c0_34 = arith.constant 0 : index
      %c0_35 = arith.constant 0 : index
      %c0_36 = arith.constant 0 : index
      %28 = vector.load %arg11[%c0_34, %c0_35, %c0_36] : memref<2x2x32xf32, #tpu.memory_space<vmem>>, vector<1x2x32xf32>
      %29 = vector.shape_cast %28 : vector<1x2x32xf32> to vector<2x32xf32>
      %30 = arith.negf %19 : vector<2x128xf32>
      %31 = math.exp %30 : vector<2x128xf32>
      %cst_37 = arith.constant 1.000000e+00 : f32
      %32 = vector.broadcast %cst_37 : f32 to vector<2x128xf32>
      %33 = arith.addf %32, %31 : vector<2x128xf32>
      %34 = arith.divf %32, %33 : vector<2x128xf32>
      %35 = math.tanh %19 : vector<2x128xf32>
      %36 = vector.extract_strided_slice %34 {offsets = [0, 0], sizes = [2, 32], strides = [1, 1]} : vector<2x128xf32> to vector<2x32xf32>
      %37 = vector.extract_strided_slice %34 {offsets = [0, 32], sizes = [2, 32], strides = [1, 1]} : vector<2x128xf32> to vector<2x32xf32>
      %38 = vector.extract_strided_slice %35 {offsets = [0, 64], sizes = [2, 32], strides = [1, 1]} : vector<2x128xf32> to vector<2x32xf32>
      %39 = vector.extract_strided_slice %34 {offsets = [0, 96], sizes = [2, 32], strides = [1, 1]} : vector<2x128xf32> to vector<2x32xf32>
      %40 = arith.mulf %37, %29 : vector<2x32xf32>
      %41 = arith.mulf %36, %38 : vector<2x32xf32>
      %42 = arith.addf %40, %41 : vector<2x32xf32>
      %43 = math.tanh %42 : vector<2x32xf32>
      %44 = arith.mulf %39, %43 : vector<2x32xf32>
      %c1_38 = arith.constant 1 : index
      %c0_39 = arith.constant 0 : index
      %c0_40 = arith.constant 0 : index
      %45 = vector.load %arg11[%c1_38, %c0_39, %c0_40] : memref<2x2x32xf32, #tpu.memory_space<vmem>>, vector<1x2x32xf32>
      %46 = vector.shape_cast %45 : vector<1x2x32xf32> to vector<2x32xf32>
      %47 = arith.negf %27 : vector<2x128xf32>
      %48 = math.exp %47 : vector<2x128xf32>
      %cst_41 = arith.constant 1.000000e+00 : f32
      %49 = vector.broadcast %cst_41 : f32 to vector<2x128xf32>
      %50 = arith.addf %49, %48 : vector<2x128xf32>
      %51 = arith.divf %49, %50 : vector<2x128xf32>
      %52 = math.tanh %27 : vector<2x128xf32>
      %53 = vector.extract_strided_slice %51 {offsets = [0, 0], sizes = [2, 32], strides = [1, 1]} : vector<2x128xf32> to vector<2x32xf32>
      %54 = vector.extract_strided_slice %51 {offsets = [0, 32], sizes = [2, 32], strides = [1, 1]} : vector<2x128xf32> to vector<2x32xf32>
      %55 = vector.extract_strided_slice %52 {offsets = [0, 64], sizes = [2, 32], strides = [1, 1]} : vector<2x128xf32> to vector<2x32xf32>
      %56 = vector.extract_strided_slice %51 {offsets = [0, 96], sizes = [2, 32], strides = [1, 1]} : vector<2x128xf32> to vector<2x32xf32>
      %57 = arith.mulf %54, %46 : vector<2x32xf32>
      %58 = arith.mulf %53, %55 : vector<2x32xf32>
      %59 = arith.addf %57, %58 : vector<2x32xf32>
      %60 = math.tanh %59 : vector<2x32xf32>
      %61 = arith.mulf %56, %60 : vector<2x32xf32>
      %c0_42 = arith.constant 0 : index
      %c0_43 = arith.constant 0 : index
      %c0_44 = arith.constant 0 : index
      %62 = vector.load %arg10[%c0_42, %c0_43, %c0_44] : memref<2x2x32xf32, #tpu.memory_space<vmem>>, vector<1x2x32xf32>
      %63 = vector.shape_cast %62 : vector<1x2x32xf32> to vector<2x32xf32>
      %64 = vector.shape_cast %44 : vector<2x32xf32> to vector<1x2x32xf32>
      tpu.vector_store %arg10[%c0_42, %c0_43, %c0_44], %64 {strides = array<i32>} : memref<2x2x32xf32, #tpu.memory_space<vmem>>, vector<1x2x32xf32>,
      %c0_45 = arith.constant 0 : index
      %c0_46 = arith.constant 0 : index
      %c0_47 = arith.constant 0 : index
      %65 = vector.load %arg11[%c0_45, %c0_46, %c0_47] : memref<2x2x32xf32, #tpu.memory_space<vmem>>, vector<1x2x32xf32>
      %66 = vector.shape_cast %65 : vector<1x2x32xf32> to vector<2x32xf32>
      %67 = vector.shape_cast %42 : vector<2x32xf32> to vector<1x2x32xf32>
      tpu.vector_store %arg11[%c0_45, %c0_46, %c0_47], %67 {strides = array<i32>} : memref<2x2x32xf32, #tpu.memory_space<vmem>>, vector<1x2x32xf32>,
      %c1_48 = arith.constant 1 : index
      %c0_49 = arith.constant 0 : index
      %c0_50 = arith.constant 0 : index
      %68 = vector.load %arg10[%c1_48, %c0_49, %c0_50] : memref<2x2x32xf32, #tpu.memory_space<vmem>>, vector<1x2x32xf32>
      %69 = vector.shape_cast %68 : vector<1x2x32xf32> to vector<2x32xf32>
      %70 = vector.shape_cast %61 : vector<2x32xf32> to vector<1x2x32xf32>
      tpu.vector_store %arg10[%c1_48, %c0_49, %c0_50], %70 {strides = array<i32>} : memref<2x2x32xf32, #tpu.memory_space<vmem>>, vector<1x2x32xf32>,
      %c1_51 = arith.constant 1 : index
      %c0_52 = arith.constant 0 : index
      %c0_53 = arith.constant 0 : index
      %71 = vector.load %arg11[%c1_51, %c0_52, %c0_53] : memref<2x2x32xf32, #tpu.memory_space<vmem>>, vector<1x2x32xf32>
      %72 = vector.shape_cast %71 : vector<1x2x32xf32> to vector<2x32xf32>
      %73 = vector.shape_cast %59 : vector<2x32xf32> to vector<1x2x32xf32>
      tpu.vector_store %arg11[%c1_51, %c0_52, %c0_53], %73 {strides = array<i32>} : memref<2x2x32xf32, #tpu.memory_space<vmem>>, vector<1x2x32xf32>,
      %c0_54 = arith.constant 0 : index
      %c0_55 = arith.constant 0 : index
      %74 = vector.load %arg8[%c0_54, %c0_55] : memref<2x32xf32, #tpu.memory_space<vmem>>, vector<2x32xf32>
      %75 = arith.index_cast %10 : i32 to index
      %c0_56 = arith.constant 0 : index
      %c0_57 = arith.constant 0 : index
      %76 = vector.load %arg6[%75, %c0_56, %c0_57] : memref<8x2x32xf32, #tpu.memory_space<vmem>>, vector<1x2x32xf32>
      %77 = vector.shape_cast %76 : vector<1x2x32xf32> to vector<2x32xf32>
      %78 = arith.addf %77, %44 : vector<2x32xf32>
      %79 = arith.maximumf %74, %78 : vector<2x32xf32>
      %c0_58 = arith.constant 0 : index
      %c0_59 = arith.constant 0 : index
      %80 = vector.load %arg8[%c0_58, %c0_59] : memref<2x32xf32, #tpu.memory_space<vmem>>, vector<2x32xf32>
      tpu.vector_store %arg8[%c0_58, %c0_59], %79 {strides = array<i32>} : memref<2x32xf32, #tpu.memory_space<vmem>>, vector<2x32xf32>,
      %c0_60 = arith.constant 0 : index
      %c0_61 = arith.constant 0 : index
      %81 = vector.load %arg9[%c0_60, %c0_61] : memref<2x32xf32, #tpu.memory_space<vmem>>, vector<2x32xf32>
      %82 = arith.index_cast %11 : i32 to index
      %c0_62 = arith.constant 0 : index
      %c0_63 = arith.constant 0 : index
      %83 = vector.load %arg7[%82, %c0_62, %c0_63] : memref<8x2x32xf32, #tpu.memory_space<vmem>>, vector<1x2x32xf32>
      %84 = vector.shape_cast %83 : vector<1x2x32xf32> to vector<2x32xf32>
      %85 = arith.addf %84, %61 : vector<2x32xf32>
      %86 = arith.maximumf %81, %85 : vector<2x32xf32>
      %c0_64 = arith.constant 0 : index
      %c0_65 = arith.constant 0 : index
      %87 = vector.load %arg9[%c0_64, %c0_65] : memref<2x32xf32, #tpu.memory_space<vmem>>, vector<2x32xf32>
      tpu.vector_store %arg9[%c0_64, %c0_65], %86 {strides = array<i32>} : memref<2x32xf32, #tpu.memory_space<vmem>>, vector<2x32xf32>,
    }
    %c8_i32_16 = arith.constant 8 : i32
    return
  }
}

module attributes {stable_mosaic.version = 11 : i64} {
  func.func @kernel(%arg0: memref<6x2x128xf32, #tpu.memory_space<vmem>>, %arg1: memref<6x2x128xf32, #tpu.memory_space<vmem>>, %arg2: memref<32x128xf32, #tpu.memory_space<vmem>>, %arg3: memref<32x128xf32, #tpu.memory_space<vmem>>, %arg4: memref<2x2x32xf32, #tpu.memory_space<vmem>>, %arg5: memref<2x2x32xf32, #tpu.memory_space<vmem>>, %arg6: memref<2x32xf32, #tpu.memory_space<vmem>>, %arg7: memref<2x32xf32, #tpu.memory_space<vmem>>, %arg8: memref<2x2x32xf32, #tpu.memory_space<vmem>>, %arg9: memref<2x2x32xf32, #tpu.memory_space<vmem>>) attributes {dimension_semantics = [], scalar_prefetch = 0 : i64, scratch_operands = 0 : i64, tpu.core_type = #tpu.core_type<tc>} {
    %c0 = arith.constant 0 : index
    %c0_0 = arith.constant 0 : index
    %c0_1 = arith.constant 0 : index
    %0 = vector.load %arg4[%c0, %c0_0, %c0_1] : memref<2x2x32xf32, #tpu.memory_space<vmem>>, vector<2x2x32xf32>
    %c0_2 = arith.constant 0 : index
    %c0_3 = arith.constant 0 : index
    %c0_4 = arith.constant 0 : index
    %1 = vector.load %arg8[%c0_2, %c0_3, %c0_4] : memref<2x2x32xf32, #tpu.memory_space<vmem>>, vector<2x2x32xf32>
    tpu.vector_store %arg8[%c0_2, %c0_3, %c0_4], %0 {strides = array<i32>} : memref<2x2x32xf32, #tpu.memory_space<vmem>>, vector<2x2x32xf32>,
    %c0_5 = arith.constant 0 : index
    %c0_6 = arith.constant 0 : index
    %c0_7 = arith.constant 0 : index
    %2 = vector.load %arg5[%c0_5, %c0_6, %c0_7] : memref<2x2x32xf32, #tpu.memory_space<vmem>>, vector<2x2x32xf32>
    %c0_8 = arith.constant 0 : index
    %c0_9 = arith.constant 0 : index
    %c0_10 = arith.constant 0 : index
    %3 = vector.load %arg9[%c0_8, %c0_9, %c0_10] : memref<2x2x32xf32, #tpu.memory_space<vmem>>, vector<2x2x32xf32>
    tpu.vector_store %arg9[%c0_8, %c0_9, %c0_10], %2 {strides = array<i32>} : memref<2x2x32xf32, #tpu.memory_space<vmem>>, vector<2x2x32xf32>,
    %cst = arith.constant 0xFF800000 : f32
    %4 = vector.broadcast %cst : f32 to vector<2x32xf32>
    %c0_11 = arith.constant 0 : index
    %c0_12 = arith.constant 0 : index
    %5 = vector.load %arg6[%c0_11, %c0_12] : memref<2x32xf32, #tpu.memory_space<vmem>>, vector<2x32xf32>
    tpu.vector_store %arg6[%c0_11, %c0_12], %4 {strides = array<i32>} : memref<2x32xf32, #tpu.memory_space<vmem>>, vector<2x32xf32>,
    %cst_13 = arith.constant 0xFF800000 : f32
    %6 = vector.broadcast %cst_13 : f32 to vector<2x32xf32>
    %c0_14 = arith.constant 0 : index
    %c0_15 = arith.constant 0 : index
    %7 = vector.load %arg7[%c0_14, %c0_15] : memref<2x32xf32, #tpu.memory_space<vmem>>, vector<2x32xf32>
    tpu.vector_store %arg7[%c0_14, %c0_15], %6 {strides = array<i32>} : memref<2x32xf32, #tpu.memory_space<vmem>>, vector<2x32xf32>,
    %c0_i32 = arith.constant 0 : i32
    %c6_i32 = arith.constant 6 : i32
    %8 = arith.addi %c0_i32, %c6_i32 : i32
    %c1_i32 = arith.constant 1 : i32
    scf.for %arg10 = %c0_i32 to %8 step %c1_i32  : i32 {
      %c1_i32_17 = arith.constant 1 : i32
      %9 = arith.muli %arg10, %c1_i32_17 : i32
      %c0_i32_18 = arith.constant 0 : i32
      %10 = arith.addi %c0_i32_18, %9 : i32
      %c5_i32 = arith.constant 5 : i32
      %11 = arith.subi %c5_i32, %10 : i32
      %12 = arith.index_cast %10 : i32 to index
      %c0_19 = arith.constant 0 : index
      %c0_20 = arith.constant 0 : index
      %13 = vector.load %arg0[%12, %c0_19, %c0_20] : memref<6x2x128xf32, #tpu.memory_space<vmem>>, vector<1x2x128xf32>
      %14 = vector.shape_cast %13 : vector<1x2x128xf32> to vector<2x128xf32>
      %c0_21 = arith.constant 0 : index
      %c0_22 = arith.constant 0 : index
      %c0_23 = arith.constant 0 : index
      %15 = vector.load %arg8[%c0_21, %c0_22, %c0_23] : memref<2x2x32xf32, #tpu.memory_space<vmem>>, vector<1x2x32xf32>
      %16 = vector.shape_cast %15 : vector<1x2x32xf32> to vector<2x32xf32>
      %c0_24 = arith.constant 0 : index
      %c0_25 = arith.constant 0 : index
      %17 = vector.load %arg2[%c0_24, %c0_25] : memref<32x128xf32, #tpu.memory_space<vmem>>, vector<32x128xf32>
      %cst_26 = arith.constant dense<0.000000e+00> : vector<2x128xf32>
      %18 = tpu.matmul %16, %17, %cst_26 {dimension_numbers = #tpu.dot_dimension_numbers<[1], [0], [0], [1], [0, 0, 1, 1], [], []>} : vector<2x32xf32>, vector<32x128xf32>, vector<2x128xf32> -> vector<2x128xf32>
      %19 = arith.addf %14, %18 : vector<2x128xf32>
      %20 = arith.index_cast %11 : i32 to index
      %c0_27 = arith.constant 0 : index
      %c0_28 = arith.constant 0 : index
      %21 = vector.load %arg1[%20, %c0_27, %c0_28] : memref<6x2x128xf32, #tpu.memory_space<vmem>>, vector<1x2x128xf32>
      %22 = vector.shape_cast %21 : vector<1x2x128xf32> to vector<2x128xf32>
      %c1 = arith.constant 1 : index
      %c0_29 = arith.constant 0 : index
      %c0_30 = arith.constant 0 : index
      %23 = vector.load %arg8[%c1, %c0_29, %c0_30] : memref<2x2x32xf32, #tpu.memory_space<vmem>>, vector<1x2x32xf32>
      %24 = vector.shape_cast %23 : vector<1x2x32xf32> to vector<2x32xf32>
      %c0_31 = arith.constant 0 : index
      %c0_32 = arith.constant 0 : index
      %25 = vector.load %arg3[%c0_31, %c0_32] : memref<32x128xf32, #tpu.memory_space<vmem>>, vector<32x128xf32>
      %cst_33 = arith.constant dense<0.000000e+00> : vector<2x128xf32>
      %26 = tpu.matmul %24, %25, %cst_33 {dimension_numbers = #tpu.dot_dimension_numbers<[1], [0], [0], [1], [0, 0, 1, 1], [], []>} : vector<2x32xf32>, vector<32x128xf32>, vector<2x128xf32> -> vector<2x128xf32>
      %27 = arith.addf %22, %26 : vector<2x128xf32>
      %c0_34 = arith.constant 0 : index
      %c0_35 = arith.constant 0 : index
      %c0_36 = arith.constant 0 : index
      %28 = vector.load %arg9[%c0_34, %c0_35, %c0_36] : memref<2x2x32xf32, #tpu.memory_space<vmem>>, vector<1x2x32xf32>
      %29 = vector.shape_cast %28 : vector<1x2x32xf32> to vector<2x32xf32>
      %30 = arith.negf %19 : vector<2x128xf32>
      %31 = math.exp %30 : vector<2x128xf32>
      %cst_37 = arith.constant 1.000000e+00 : f32
      %32 = vector.broadcast %cst_37 : f32 to vector<2x128xf32>
      %33 = arith.addf %32, %31 : vector<2x128xf32>
      %34 = arith.divf %32, %33 : vector<2x128xf32>
      %35 = math.tanh %19 : vector<2x128xf32>
      %36 = vector.extract_strided_slice %34 {offsets = [0, 0], sizes = [2, 32], strides = [1, 1]} : vector<2x128xf32> to vector<2x32xf32>
      %37 = vector.extract_strided_slice %34 {offsets = [0, 32], sizes = [2, 32], strides = [1, 1]} : vector<2x128xf32> to vector<2x32xf32>
      %38 = vector.extract_strided_slice %35 {offsets = [0, 64], sizes = [2, 32], strides = [1, 1]} : vector<2x128xf32> to vector<2x32xf32>
      %39 = vector.extract_strided_slice %34 {offsets = [0, 96], sizes = [2, 32], strides = [1, 1]} : vector<2x128xf32> to vector<2x32xf32>
      %40 = arith.mulf %37, %29 : vector<2x32xf32>
      %41 = arith.mulf %36, %38 : vector<2x32xf32>
      %42 = arith.addf %40, %41 : vector<2x32xf32>
      %43 = math.tanh %42 : vector<2x32xf32>
      %44 = arith.mulf %39, %43 : vector<2x32xf32>
      %c1_38 = arith.constant 1 : index
      %c0_39 = arith.constant 0 : index
      %c0_40 = arith.constant 0 : index
      %45 = vector.load %arg9[%c1_38, %c0_39, %c0_40] : memref<2x2x32xf32, #tpu.memory_space<vmem>>, vector<1x2x32xf32>
      %46 = vector.shape_cast %45 : vector<1x2x32xf32> to vector<2x32xf32>
      %47 = arith.negf %27 : vector<2x128xf32>
      %48 = math.exp %47 : vector<2x128xf32>
      %cst_41 = arith.constant 1.000000e+00 : f32
      %49 = vector.broadcast %cst_41 : f32 to vector<2x128xf32>
      %50 = arith.addf %49, %48 : vector<2x128xf32>
      %51 = arith.divf %49, %50 : vector<2x128xf32>
      %52 = math.tanh %27 : vector<2x128xf32>
      %53 = vector.extract_strided_slice %51 {offsets = [0, 0], sizes = [2, 32], strides = [1, 1]} : vector<2x128xf32> to vector<2x32xf32>
      %54 = vector.extract_strided_slice %51 {offsets = [0, 32], sizes = [2, 32], strides = [1, 1]} : vector<2x128xf32> to vector<2x32xf32>
      %55 = vector.extract_strided_slice %52 {offsets = [0, 64], sizes = [2, 32], strides = [1, 1]} : vector<2x128xf32> to vector<2x32xf32>
      %56 = vector.extract_strided_slice %51 {offsets = [0, 96], sizes = [2, 32], strides = [1, 1]} : vector<2x128xf32> to vector<2x32xf32>
      %57 = arith.mulf %54, %46 : vector<2x32xf32>
      %58 = arith.mulf %53, %55 : vector<2x32xf32>
      %59 = arith.addf %57, %58 : vector<2x32xf32>
      %60 = math.tanh %59 : vector<2x32xf32>
      %61 = arith.mulf %56, %60 : vector<2x32xf32>
      %c0_42 = arith.constant 0 : index
      %c0_43 = arith.constant 0 : index
      %c0_44 = arith.constant 0 : index
      %62 = vector.load %arg8[%c0_42, %c0_43, %c0_44] : memref<2x2x32xf32, #tpu.memory_space<vmem>>, vector<1x2x32xf32>
      %63 = vector.shape_cast %62 : vector<1x2x32xf32> to vector<2x32xf32>
      %64 = vector.shape_cast %44 : vector<2x32xf32> to vector<1x2x32xf32>
      tpu.vector_store %arg8[%c0_42, %c0_43, %c0_44], %64 {strides = array<i32>} : memref<2x2x32xf32, #tpu.memory_space<vmem>>, vector<1x2x32xf32>,
      %c0_45 = arith.constant 0 : index
      %c0_46 = arith.constant 0 : index
      %c0_47 = arith.constant 0 : index
      %65 = vector.load %arg9[%c0_45, %c0_46, %c0_47] : memref<2x2x32xf32, #tpu.memory_space<vmem>>, vector<1x2x32xf32>
      %66 = vector.shape_cast %65 : vector<1x2x32xf32> to vector<2x32xf32>
      %67 = vector.shape_cast %42 : vector<2x32xf32> to vector<1x2x32xf32>
      tpu.vector_store %arg9[%c0_45, %c0_46, %c0_47], %67 {strides = array<i32>} : memref<2x2x32xf32, #tpu.memory_space<vmem>>, vector<1x2x32xf32>,
      %c1_48 = arith.constant 1 : index
      %c0_49 = arith.constant 0 : index
      %c0_50 = arith.constant 0 : index
      %68 = vector.load %arg8[%c1_48, %c0_49, %c0_50] : memref<2x2x32xf32, #tpu.memory_space<vmem>>, vector<1x2x32xf32>
      %69 = vector.shape_cast %68 : vector<1x2x32xf32> to vector<2x32xf32>
      %70 = vector.shape_cast %61 : vector<2x32xf32> to vector<1x2x32xf32>
      tpu.vector_store %arg8[%c1_48, %c0_49, %c0_50], %70 {strides = array<i32>} : memref<2x2x32xf32, #tpu.memory_space<vmem>>, vector<1x2x32xf32>,
      %c1_51 = arith.constant 1 : index
      %c0_52 = arith.constant 0 : index
      %c0_53 = arith.constant 0 : index
      %71 = vector.load %arg9[%c1_51, %c0_52, %c0_53] : memref<2x2x32xf32, #tpu.memory_space<vmem>>, vector<1x2x32xf32>
      %72 = vector.shape_cast %71 : vector<1x2x32xf32> to vector<2x32xf32>
      %73 = vector.shape_cast %59 : vector<2x32xf32> to vector<1x2x32xf32>
      tpu.vector_store %arg9[%c1_51, %c0_52, %c0_53], %73 {strides = array<i32>} : memref<2x2x32xf32, #tpu.memory_space<vmem>>, vector<1x2x32xf32>,
      %c0_54 = arith.constant 0 : index
      %c0_55 = arith.constant 0 : index
      %74 = vector.load %arg6[%c0_54, %c0_55] : memref<2x32xf32, #tpu.memory_space<vmem>>, vector<2x32xf32>
      %75 = arith.maximumf %74, %44 : vector<2x32xf32>
      %c0_56 = arith.constant 0 : index
      %c0_57 = arith.constant 0 : index
      %76 = vector.load %arg6[%c0_56, %c0_57] : memref<2x32xf32, #tpu.memory_space<vmem>>, vector<2x32xf32>
      tpu.vector_store %arg6[%c0_56, %c0_57], %75 {strides = array<i32>} : memref<2x32xf32, #tpu.memory_space<vmem>>, vector<2x32xf32>,
      %c0_58 = arith.constant 0 : index
      %c0_59 = arith.constant 0 : index
      %77 = vector.load %arg7[%c0_58, %c0_59] : memref<2x32xf32, #tpu.memory_space<vmem>>, vector<2x32xf32>
      %78 = arith.maximumf %77, %61 : vector<2x32xf32>
      %c0_60 = arith.constant 0 : index
      %c0_61 = arith.constant 0 : index
      %79 = vector.load %arg7[%c0_60, %c0_61] : memref<2x32xf32, #tpu.memory_space<vmem>>, vector<2x32xf32>
      tpu.vector_store %arg7[%c0_60, %c0_61], %78 {strides = array<i32>} : memref<2x32xf32, #tpu.memory_space<vmem>>, vector<2x32xf32>,
    }
    %c6_i32_16 = arith.constant 6 : i32
    return
  }
}

module attributes {stable_mosaic.version = 11 : i64} {
  func.func @kernel(%arg0: memref<4x2x128xf32, #tpu.memory_space<vmem>>, %arg1: memref<4x2x128xf32, #tpu.memory_space<vmem>>, %arg2: memref<32x128xf32, #tpu.memory_space<vmem>>, %arg3: memref<32x128xf32, #tpu.memory_space<vmem>>, %arg4: memref<2x2x32xf32, #tpu.memory_space<vmem>>, %arg5: memref<2x2x32xf32, #tpu.memory_space<vmem>>, %arg6: memref<2x32xf32, #tpu.memory_space<vmem>>, %arg7: memref<2x32xf32, #tpu.memory_space<vmem>>, %arg8: memref<2x2x32xf32, #tpu.memory_space<vmem>>, %arg9: memref<2x2x32xf32, #tpu.memory_space<vmem>>) attributes {dimension_semantics = [], scalar_prefetch = 0 : i64, scratch_operands = 0 : i64, tpu.core_type = #tpu.core_type<tc>} {
    %c0 = arith.constant 0 : index
    %c0_0 = arith.constant 0 : index
    %c0_1 = arith.constant 0 : index
    %0 = vector.load %arg4[%c0, %c0_0, %c0_1] : memref<2x2x32xf32, #tpu.memory_space<vmem>>, vector<2x2x32xf32>
    %c0_2 = arith.constant 0 : index
    %c0_3 = arith.constant 0 : index
    %c0_4 = arith.constant 0 : index
    %1 = vector.load %arg8[%c0_2, %c0_3, %c0_4] : memref<2x2x32xf32, #tpu.memory_space<vmem>>, vector<2x2x32xf32>
    tpu.vector_store %arg8[%c0_2, %c0_3, %c0_4], %0 {strides = array<i32>} : memref<2x2x32xf32, #tpu.memory_space<vmem>>, vector<2x2x32xf32>,
    %c0_5 = arith.constant 0 : index
    %c0_6 = arith.constant 0 : index
    %c0_7 = arith.constant 0 : index
    %2 = vector.load %arg5[%c0_5, %c0_6, %c0_7] : memref<2x2x32xf32, #tpu.memory_space<vmem>>, vector<2x2x32xf32>
    %c0_8 = arith.constant 0 : index
    %c0_9 = arith.constant 0 : index
    %c0_10 = arith.constant 0 : index
    %3 = vector.load %arg9[%c0_8, %c0_9, %c0_10] : memref<2x2x32xf32, #tpu.memory_space<vmem>>, vector<2x2x32xf32>
    tpu.vector_store %arg9[%c0_8, %c0_9, %c0_10], %2 {strides = array<i32>} : memref<2x2x32xf32, #tpu.memory_space<vmem>>, vector<2x2x32xf32>,
    %cst = arith.constant 0xFF800000 : f32
    %4 = vector.broadcast %cst : f32 to vector<2x32xf32>
    %c0_11 = arith.constant 0 : index
    %c0_12 = arith.constant 0 : index
    %5 = vector.load %arg6[%c0_11, %c0_12] : memref<2x32xf32, #tpu.memory_space<vmem>>, vector<2x32xf32>
    tpu.vector_store %arg6[%c0_11, %c0_12], %4 {strides = array<i32>} : memref<2x32xf32, #tpu.memory_space<vmem>>, vector<2x32xf32>,
    %cst_13 = arith.constant 0xFF800000 : f32
    %6 = vector.broadcast %cst_13 : f32 to vector<2x32xf32>
    %c0_14 = arith.constant 0 : index
    %c0_15 = arith.constant 0 : index
    %7 = vector.load %arg7[%c0_14, %c0_15] : memref<2x32xf32, #tpu.memory_space<vmem>>, vector<2x32xf32>
    tpu.vector_store %arg7[%c0_14, %c0_15], %6 {strides = array<i32>} : memref<2x32xf32, #tpu.memory_space<vmem>>, vector<2x32xf32>,
    %c0_i32 = arith.constant 0 : i32
    %c4_i32 = arith.constant 4 : i32
    %8 = arith.addi %c0_i32, %c4_i32 : i32
    %c1_i32 = arith.constant 1 : i32
    scf.for %arg10 = %c0_i32 to %8 step %c1_i32  : i32 {
      %c1_i32_17 = arith.constant 1 : i32
      %9 = arith.muli %arg10, %c1_i32_17 : i32
      %c0_i32_18 = arith.constant 0 : i32
      %10 = arith.addi %c0_i32_18, %9 : i32
      %c3_i32 = arith.constant 3 : i32
      %11 = arith.subi %c3_i32, %10 : i32
      %12 = arith.index_cast %10 : i32 to index
      %c0_19 = arith.constant 0 : index
      %c0_20 = arith.constant 0 : index
      %13 = vector.load %arg0[%12, %c0_19, %c0_20] : memref<4x2x128xf32, #tpu.memory_space<vmem>>, vector<1x2x128xf32>
      %14 = vector.shape_cast %13 : vector<1x2x128xf32> to vector<2x128xf32>
      %c0_21 = arith.constant 0 : index
      %c0_22 = arith.constant 0 : index
      %c0_23 = arith.constant 0 : index
      %15 = vector.load %arg8[%c0_21, %c0_22, %c0_23] : memref<2x2x32xf32, #tpu.memory_space<vmem>>, vector<1x2x32xf32>
      %16 = vector.shape_cast %15 : vector<1x2x32xf32> to vector<2x32xf32>
      %c0_24 = arith.constant 0 : index
      %c0_25 = arith.constant 0 : index
      %17 = vector.load %arg2[%c0_24, %c0_25] : memref<32x128xf32, #tpu.memory_space<vmem>>, vector<32x128xf32>
      %cst_26 = arith.constant dense<0.000000e+00> : vector<2x128xf32>
      %18 = tpu.matmul %16, %17, %cst_26 {dimension_numbers = #tpu.dot_dimension_numbers<[1], [0], [0], [1], [0, 0, 1, 1], [], []>} : vector<2x32xf32>, vector<32x128xf32>, vector<2x128xf32> -> vector<2x128xf32>
      %19 = arith.addf %14, %18 : vector<2x128xf32>
      %20 = arith.index_cast %11 : i32 to index
      %c0_27 = arith.constant 0 : index
      %c0_28 = arith.constant 0 : index
      %21 = vector.load %arg1[%20, %c0_27, %c0_28] : memref<4x2x128xf32, #tpu.memory_space<vmem>>, vector<1x2x128xf32>
      %22 = vector.shape_cast %21 : vector<1x2x128xf32> to vector<2x128xf32>
      %c1 = arith.constant 1 : index
      %c0_29 = arith.constant 0 : index
      %c0_30 = arith.constant 0 : index
      %23 = vector.load %arg8[%c1, %c0_29, %c0_30] : memref<2x2x32xf32, #tpu.memory_space<vmem>>, vector<1x2x32xf32>
      %24 = vector.shape_cast %23 : vector<1x2x32xf32> to vector<2x32xf32>
      %c0_31 = arith.constant 0 : index
      %c0_32 = arith.constant 0 : index
      %25 = vector.load %arg3[%c0_31, %c0_32] : memref<32x128xf32, #tpu.memory_space<vmem>>, vector<32x128xf32>
      %cst_33 = arith.constant dense<0.000000e+00> : vector<2x128xf32>
      %26 = tpu.matmul %24, %25, %cst_33 {dimension_numbers = #tpu.dot_dimension_numbers<[1], [0], [0], [1], [0, 0, 1, 1], [], []>} : vector<2x32xf32>, vector<32x128xf32>, vector<2x128xf32> -> vector<2x128xf32>
      %27 = arith.addf %22, %26 : vector<2x128xf32>
      %c0_34 = arith.constant 0 : index
      %c0_35 = arith.constant 0 : index
      %c0_36 = arith.constant 0 : index
      %28 = vector.load %arg9[%c0_34, %c0_35, %c0_36] : memref<2x2x32xf32, #tpu.memory_space<vmem>>, vector<1x2x32xf32>
      %29 = vector.shape_cast %28 : vector<1x2x32xf32> to vector<2x32xf32>
      %30 = arith.negf %19 : vector<2x128xf32>
      %31 = math.exp %30 : vector<2x128xf32>
      %cst_37 = arith.constant 1.000000e+00 : f32
      %32 = vector.broadcast %cst_37 : f32 to vector<2x128xf32>
      %33 = arith.addf %32, %31 : vector<2x128xf32>
      %34 = arith.divf %32, %33 : vector<2x128xf32>
      %35 = math.tanh %19 : vector<2x128xf32>
      %36 = vector.extract_strided_slice %34 {offsets = [0, 0], sizes = [2, 32], strides = [1, 1]} : vector<2x128xf32> to vector<2x32xf32>
      %37 = vector.extract_strided_slice %34 {offsets = [0, 32], sizes = [2, 32], strides = [1, 1]} : vector<2x128xf32> to vector<2x32xf32>
      %38 = vector.extract_strided_slice %35 {offsets = [0, 64], sizes = [2, 32], strides = [1, 1]} : vector<2x128xf32> to vector<2x32xf32>
      %39 = vector.extract_strided_slice %34 {offsets = [0, 96], sizes = [2, 32], strides = [1, 1]} : vector<2x128xf32> to vector<2x32xf32>
      %40 = arith.mulf %37, %29 : vector<2x32xf32>
      %41 = arith.mulf %36, %38 : vector<2x32xf32>
      %42 = arith.addf %40, %41 : vector<2x32xf32>
      %43 = math.tanh %42 : vector<2x32xf32>
      %44 = arith.mulf %39, %43 : vector<2x32xf32>
      %c1_38 = arith.constant 1 : index
      %c0_39 = arith.constant 0 : index
      %c0_40 = arith.constant 0 : index
      %45 = vector.load %arg9[%c1_38, %c0_39, %c0_40] : memref<2x2x32xf32, #tpu.memory_space<vmem>>, vector<1x2x32xf32>
      %46 = vector.shape_cast %45 : vector<1x2x32xf32> to vector<2x32xf32>
      %47 = arith.negf %27 : vector<2x128xf32>
      %48 = math.exp %47 : vector<2x128xf32>
      %cst_41 = arith.constant 1.000000e+00 : f32
      %49 = vector.broadcast %cst_41 : f32 to vector<2x128xf32>
      %50 = arith.addf %49, %48 : vector<2x128xf32>
      %51 = arith.divf %49, %50 : vector<2x128xf32>
      %52 = math.tanh %27 : vector<2x128xf32>
      %53 = vector.extract_strided_slice %51 {offsets = [0, 0], sizes = [2, 32], strides = [1, 1]} : vector<2x128xf32> to vector<2x32xf32>
      %54 = vector.extract_strided_slice %51 {offsets = [0, 32], sizes = [2, 32], strides = [1, 1]} : vector<2x128xf32> to vector<2x32xf32>
      %55 = vector.extract_strided_slice %52 {offsets = [0, 64], sizes = [2, 32], strides = [1, 1]} : vector<2x128xf32> to vector<2x32xf32>
      %56 = vector.extract_strided_slice %51 {offsets = [0, 96], sizes = [2, 32], strides = [1, 1]} : vector<2x128xf32> to vector<2x32xf32>
      %57 = arith.mulf %54, %46 : vector<2x32xf32>
      %58 = arith.mulf %53, %55 : vector<2x32xf32>
      %59 = arith.addf %57, %58 : vector<2x32xf32>
      %60 = math.tanh %59 : vector<2x32xf32>
      %61 = arith.mulf %56, %60 : vector<2x32xf32>
      %c0_42 = arith.constant 0 : index
      %c0_43 = arith.constant 0 : index
      %c0_44 = arith.constant 0 : index
      %62 = vector.load %arg8[%c0_42, %c0_43, %c0_44] : memref<2x2x32xf32, #tpu.memory_space<vmem>>, vector<1x2x32xf32>
      %63 = vector.shape_cast %62 : vector<1x2x32xf32> to vector<2x32xf32>
      %64 = vector.shape_cast %44 : vector<2x32xf32> to vector<1x2x32xf32>
      tpu.vector_store %arg8[%c0_42, %c0_43, %c0_44], %64 {strides = array<i32>} : memref<2x2x32xf32, #tpu.memory_space<vmem>>, vector<1x2x32xf32>,
      %c0_45 = arith.constant 0 : index
      %c0_46 = arith.constant 0 : index
      %c0_47 = arith.constant 0 : index
      %65 = vector.load %arg9[%c0_45, %c0_46, %c0_47] : memref<2x2x32xf32, #tpu.memory_space<vmem>>, vector<1x2x32xf32>
      %66 = vector.shape_cast %65 : vector<1x2x32xf32> to vector<2x32xf32>
      %67 = vector.shape_cast %42 : vector<2x32xf32> to vector<1x2x32xf32>
      tpu.vector_store %arg9[%c0_45, %c0_46, %c0_47], %67 {strides = array<i32>} : memref<2x2x32xf32, #tpu.memory_space<vmem>>, vector<1x2x32xf32>,
      %c1_48 = arith.constant 1 : index
      %c0_49 = arith.constant 0 : index
      %c0_50 = arith.constant 0 : index
      %68 = vector.load %arg8[%c1_48, %c0_49, %c0_50] : memref<2x2x32xf32, #tpu.memory_space<vmem>>, vector<1x2x32xf32>
      %69 = vector.shape_cast %68 : vector<1x2x32xf32> to vector<2x32xf32>
      %70 = vector.shape_cast %61 : vector<2x32xf32> to vector<1x2x32xf32>
      tpu.vector_store %arg8[%c1_48, %c0_49, %c0_50], %70 {strides = array<i32>} : memref<2x2x32xf32, #tpu.memory_space<vmem>>, vector<1x2x32xf32>,
      %c1_51 = arith.constant 1 : index
      %c0_52 = arith.constant 0 : index
      %c0_53 = arith.constant 0 : index
      %71 = vector.load %arg9[%c1_51, %c0_52, %c0_53] : memref<2x2x32xf32, #tpu.memory_space<vmem>>, vector<1x2x32xf32>
      %72 = vector.shape_cast %71 : vector<1x2x32xf32> to vector<2x32xf32>
      %73 = vector.shape_cast %59 : vector<2x32xf32> to vector<1x2x32xf32>
      tpu.vector_store %arg9[%c1_51, %c0_52, %c0_53], %73 {strides = array<i32>} : memref<2x2x32xf32, #tpu.memory_space<vmem>>, vector<1x2x32xf32>,
      %c0_54 = arith.constant 0 : index
      %c0_55 = arith.constant 0 : index
      %74 = vector.load %arg6[%c0_54, %c0_55] : memref<2x32xf32, #tpu.memory_space<vmem>>, vector<2x32xf32>
      %75 = arith.maximumf %74, %44 : vector<2x32xf32>
      %c0_56 = arith.constant 0 : index
      %c0_57 = arith.constant 0 : index
      %76 = vector.load %arg6[%c0_56, %c0_57] : memref<2x32xf32, #tpu.memory_space<vmem>>, vector<2x32xf32>
      tpu.vector_store %arg6[%c0_56, %c0_57], %75 {strides = array<i32>} : memref<2x32xf32, #tpu.memory_space<vmem>>, vector<2x32xf32>,
      %c0_58 = arith.constant 0 : index
      %c0_59 = arith.constant 0 : index
      %77 = vector.load %arg7[%c0_58, %c0_59] : memref<2x32xf32, #tpu.memory_space<vmem>>, vector<2x32xf32>
      %78 = arith.maximumf %77, %61 : vector<2x32xf32>
      %c0_60 = arith.constant 0 : index
      %c0_61 = arith.constant 0 : index
      %79 = vector.load %arg7[%c0_60, %c0_61] : memref<2x32xf32, #tpu.memory_space<vmem>>, vector<2x32xf32>
      tpu.vector_store %arg7[%c0_60, %c0_61], %78 {strides = array<i32>} : memref<2x32xf32, #tpu.memory_space<vmem>>, vector<2x32xf32>,
    }
    %c4_i32_16 = arith.constant 4 : i32
    return
  }
}

module attributes {stable_mosaic.version = 11 : i64} {
  func.func @_cosine_kernel(%arg0: memref<2x32xf32, #tpu.memory_space<vmem>>, %arg1: memref<2x32xf32, #tpu.memory_space<vmem>>, %arg2: memref<2x32xf32, #tpu.memory_space<vmem>>, %arg3: memref<2x32xf32, #tpu.memory_space<vmem>>, %arg4: memref<2x32xf32, #tpu.memory_space<vmem>>, %arg5: memref<2x32xf32, #tpu.memory_space<vmem>>, %arg6: memref<2x1xf32, #tpu.memory_space<vmem>>) attributes {dimension_semantics = [], scalar_prefetch = 0 : i64, scratch_operands = 0 : i64, tpu.core_type = #tpu.core_type<tc>} {
    %c0 = arith.constant 0 : index
    %c0_0 = arith.constant 0 : index
    %0 = vector.load %arg0[%c0, %c0_0] : memref<2x32xf32, #tpu.memory_space<vmem>>, vector<2x32xf32>
    %c0_1 = arith.constant 0 : index
    %c0_2 = arith.constant 0 : index
    %1 = vector.load %arg1[%c0_1, %c0_2] : memref<2x32xf32, #tpu.memory_space<vmem>>, vector<2x32xf32>
    %c0_3 = arith.constant 0 : index
    %c0_4 = arith.constant 0 : index
    %2 = vector.load %arg2[%c0_3, %c0_4] : memref<2x32xf32, #tpu.memory_space<vmem>>, vector<2x32xf32>
    %c0_5 = arith.constant 0 : index
    %c0_6 = arith.constant 0 : index
    %3 = vector.load %arg4[%c0_5, %c0_6] : memref<2x32xf32, #tpu.memory_space<vmem>>, vector<2x32xf32>
    %4 = arith.maximumf %2, %3 : vector<2x32xf32>
    %c0_7 = arith.constant 0 : index
    %c0_8 = arith.constant 0 : index
    %5 = vector.load %arg3[%c0_7, %c0_8] : memref<2x32xf32, #tpu.memory_space<vmem>>, vector<2x32xf32>
    %c0_9 = arith.constant 0 : index
    %c0_10 = arith.constant 0 : index
    %6 = vector.load %arg5[%c0_9, %c0_10] : memref<2x32xf32, #tpu.memory_space<vmem>>, vector<2x32xf32>
    %7 = arith.maximumf %5, %6 : vector<2x32xf32>
    %8 = arith.mulf %0, %4 : vector<2x32xf32>
    %9 = arith.mulf %1, %7 : vector<2x32xf32>
    %10 = arith.addf %8, %9 : vector<2x32xf32>
    %cst = arith.constant dense<0.000000e+00> : vector<2xf32>
    %11 = vector.multi_reduction <add>, %10, %cst [1] : vector<2x32xf32> to vector<2xf32>
    %12 = vector.shape_cast %11 : vector<2xf32> to vector<2x1xf32>
    %13 = arith.mulf %0, %0 : vector<2x32xf32>
    %14 = arith.mulf %1, %1 : vector<2x32xf32>
    %15 = arith.addf %13, %14 : vector<2x32xf32>
    %cst_11 = arith.constant dense<0.000000e+00> : vector<2xf32>
    %16 = vector.multi_reduction <add>, %15, %cst_11 [1] : vector<2x32xf32> to vector<2xf32>
    %17 = vector.shape_cast %16 : vector<2xf32> to vector<2x1xf32>
    %18 = arith.mulf %4, %4 : vector<2x32xf32>
    %19 = arith.mulf %7, %7 : vector<2x32xf32>
    %20 = arith.addf %18, %19 : vector<2x32xf32>
    %cst_12 = arith.constant dense<0.000000e+00> : vector<2xf32>
    %21 = vector.multi_reduction <add>, %20, %cst_12 [1] : vector<2x32xf32> to vector<2xf32>
    %22 = vector.shape_cast %21 : vector<2xf32> to vector<2x1xf32>
    %23 = arith.mulf %17, %22 : vector<2x1xf32>
    %24 = math.sqrt %23 : vector<2x1xf32>
    %cst_13 = arith.constant 9.99999993E-9 : f32
    %25 = vector.broadcast %cst_13 : f32 to vector<2x1xf32>
    %26 = arith.maximumf %24, %25 : vector<2x1xf32>
    %27 = arith.divf %12, %26 : vector<2x1xf32>
    %c0_14 = arith.constant 0 : index
    %c0_15 = arith.constant 0 : index
    %28 = vector.load %arg6[%c0_14, %c0_15] : memref<2x1xf32, #tpu.memory_space<vmem>>, vector<2x1xf32>
    tpu.vector_store %arg6[%c0_14, %c0_15], %27 {strides = array<i32>} : memref<2x1xf32, #tpu.memory_space<vmem>>, vector<2x1xf32>,
    return
  }
}

</mosaic_0001>

<llo_original>
// kernel: _forward.5
$region0: #{_forward.5}
  #allocation0 [shape = 'u32[]', space=smem, size = 0x4, offset = 0x4, fixed_abs, tag = 'smem constant byte address 0x4 - core index']
  #allocation1 [shape = 'u32[144,128]{1,0:T(1,128)}', space=vmem, size = 0x12000, scoped, tag = 'internal scratch']
  %s0 = inlined_call_operand.vmem [shape: f32[8,2,128], index: 0, kind: input, shape index: {}]
  %s1 = inlined_call_operand.vmem [shape: f32[8,2,128], index: 1, kind: input, shape index: {}]
  %s2 = inlined_call_operand.vmem [shape: f32[32,128], index: 2, kind: input, shape index: {}]
  %s3 = inlined_call_operand.vmem [shape: f32[32,128], index: 3, kind: input, shape index: {}]
  %s4 = inlined_call_operand.vmem [shape: f32[2,2,32], index: 4, kind: input, shape index: {}, may-alias: {4,5}]
  %s5 = inlined_call_operand.vmem [shape: f32[2,2,32], index: 5, kind: input, shape index: {}, may-alias: {4,5}]
  %s6 = inlined_call_operand.vmem [shape: f32[8,2,32], index: 6, kind: output, shape index: {0}]
  %s7 = inlined_call_operand.vmem [shape: f32[8,2,32], index: 7, kind: output, shape index: {1}]
  %s8 = inlined_call_operand.hbm [shape: f32[2,32], index: 8, kind: output, shape index: {2}]
  %s9 = inlined_call_operand.hbm [shape: f32[2,32], index: 9, kind: output, shape index: {3}]
  %s10 = inlined_call_operand.hbm [shape: f32[2,2,32], index: 10, kind: output, shape index: {4}]
  %s11 = inlined_call_operand.hbm [shape: f32[2,2,32], index: 11, kind: output, shape index: {5}]
  %12 = xla_tuple %s6, %s7, %s8, %s9, %s10, %s11
  %s13 = sld [smem:[#allocation0]]
  $region81: #{_forward.5} parent=0
    _
  %s15 = ssub.s32 1, %s13
  %s16 = scalar_select 0, %s15, %s13
  $region1: #{_forward.5} parent=0
    #allocation2 [shape = 'u8[1024]{0}', space=vmem, size = 0x400, scoped, tag = 'output window, operand 2, single buffered']
    #allocation3 [shape = 's32[1]{0}', space=sflag, size = 0x4, scoped, tag = 'scoped memory for _forward.5']
    #allocation4 [shape = 'u8[1024]{0}', space=vmem, size = 0x400, scoped, tag = 'output window, operand 3, single buffered']
    #allocation5 [shape = 's32[1]{0}', space=sflag, size = 0x4, scoped, tag = 'scoped memory for _forward.5']
    #allocation6 [shape = 'u8[2048]{0}', space=vmem, size = 0x800, scoped, tag = 'output window, operand 4, single buffered']
    #allocation7 [shape = 'u8[2048]{0}', space=vmem, size = 0x800, scoped, tag = 'output window, operand 5, single buffered']
    #allocation8 [shape = 's32[1]{0}', space=sflag, size = 0x4, scoped, tag = 'scoped memory for _forward.5']
    %17 = vsyncpa [#allocation3], 0
    %18 = vsyncpa [#allocation5], 0
    %19 = vsyncpa [#allocation8], 0
    // Predicated region
    $region2: #{_forward.5} parent=1 // pred_check
      _
    $region3: #{_forward.5} parent=1 // pred_check_branch
      %21 = sbr.rel (0) target = $region5
    $region4: #{_forward.5} parent=1 // pred_region
      _
    $region5: #{_forward.5} parent=1 // pred_fallthru
      _
    // Predicated region
    $region6: #{_forward.5} parent=1 // pred_check
      _
    $region7: #{_forward.5} parent=1 // pred_check_branch
      %23 = sbr.rel (0) target = $region9
    $region8: #{_forward.5} parent=1 // pred_region
      _
    $region9: #{_forward.5} parent=1 // pred_fallthru
      _
    // Predicated region
    $region10: #{_forward.5} parent=1 // pred_check
      _
    $region11: #{_forward.5} parent=1 // pred_check_branch
      %25 = sbr.rel (0) target = $region13
    $region12: #{_forward.5} parent=1 // pred_region
      _
    $region13: #{_forward.5} parent=1 // pred_fallthru
      _
    // Predicated region
    $region14: #{_forward.5} parent=1 // pred_check
      _
    $region15: #{_forward.5} parent=1 // pred_check_branch
      %27 = sbr.rel (0) target = $region17
    $region16: #{_forward.5} parent=1 // pred_region
      _
    $region17: #{_forward.5} parent=1 // pred_fallthru
      _
    // Predicated region
    $region18: #{_forward.5} parent=1 // pred_check
      _
    $region19: #{_forward.5} parent=1 // pred_check_branch
      %29 = sbr.rel (0) target = $region21
    $region20: #{_forward.5} parent=1 // pred_region
      _
    $region21: #{_forward.5} parent=1 // pred_fallthru
      _
    // Predicated region
    $region22: #{_forward.5} parent=1 // pred_check
      _
    $region23: #{_forward.5} parent=1 // pred_check_branch
      %31 = sbr.rel (0) target = $region25
    $region24: #{_forward.5} parent=1 // pred_region
      _
    $region25: #{_forward.5} parent=1 // pred_fallthru
      _
    %v32 = vld [vmem:[%s4] sm:$0x3]
    %v33 = vld [vmem:[%s4 + $0x2] sm:$0x3]
    %vm34 = vcmask 254976
    %35 = vst.msk [vmem:[#allocation6] sm:$0x3] %vm34, %v32
    %36 = vst.msk [vmem:[#allocation6 + $0x2] sm:$0x3] %vm34, %v33
    %v37 = vld [vmem:[%s5] sm:$0x3]
    %v38 = vld [vmem:[%s5 + $0x2] sm:$0x3]
    %39 = vst.msk [vmem:[#allocation7] sm:$0x3] %vm34, %v37
    %40 = vst.msk [vmem:[#allocation7 + $0x2] sm:$0x3] %vm34, %v38
    %41 = vst.msk [vmem:[#allocation2] sm:$0x3] %vm34, -inf
    %42 = vst.msk [vmem:[#allocation4] sm:$0x3] %vm34, -inf
    loop: start=0, step=1, limit=8
    $region26: #{_forward.5} parent=1 // loop_pre_header
      _
    $region27: #{_forward.5} parent=1 // loop_header
      %s44 = sphi 0, %s48
      %p45 = scmp.ge.s32.totalorder %s44, 8
    $region28: #{_forward.5} parent=1 // loop_header_branch
      %47 = sbr.rel (%p45) target = $region32
    $region29: #{_forward.5} parent=1 // loop_body
      %s49 = ssub.s32 7, %s44
      %s50 = smul.u32 %s44, 2
      %s51 = scalar_lea.vmem %s0, %s50
      %v52 = vld [vmem:[%s51] sm:$0x3]
      %v53 = vld [vmem:[#allocation6] sm:$0x3]
      %v54 = vld [vmem:[%s2] sm:$0xff]
      %v55 = vld [vmem:[%s2 + $0x8] sm:$0xff]
      %v56 = vld [vmem:[%s2 + $0x10] sm:$0xff]
      %v57 = vld [vmem:[%s2 + $0x18] sm:$0xff]
      %vm58 = vcmask 261120
      %v60 = vsel %vm58, %v53, 0
      %62 = vmatprep.subr.mxu0 0.0
      %63 = vmatpush1.msra.mxu0 %v54
      %64 = vmatprep.subr.mxu0 0.0
      %65 = vmatpush1.msra.mxu0 %v55
      %66 = vmatprep.subr.mxu0 0.0
      %67 = vmatpush1.msra.mxu0 %v56
      %68 = vmatprep.subr.mxu0 0.0
      %69 = vmatpush1.msra.mxu0 %v57
      %70 = vmatprep.subr.mxu0 0.0
      %71 = vmatpush1.msra.mxu0 0.0
      %72 = vmatprep.subr.mxu0 0.0
      %73 = vmatpush1.msra.mxu0 0.0
      %74 = vmatprep.subr.mxu0 0.0
      %75 = vmatpush1.msra.mxu0 0.0
      %76 = vmatprep.subr.mxu0 0.0
      %77 = vmatpush1.msra.mxu0 0.0
      %78 = vmatprep.subr.mxu0 0.0
      %79 = vmatpush1.msra.mxu0 0.0
      %80 = vmatprep.subr.mxu0 0.0
      %81 = vmatpush1.msra.mxu0 0.0
      %82 = vmatprep.subr.mxu0 0.0
      %83 = vmatpush1.msra.mxu0 0.0
      %84 = vmatprep.subr.mxu0 0.0
      %85 = vmatpush1.msra.mxu0 0.0
      %86 = vmatprep.subr.mxu0 0.0
      %87 = vmatpush1.msra.mxu0 0.0
      %88 = vmatprep.subr.mxu0 0.0
      %89 = vmatpush1.msra.mxu0 0.0
      %90 = vmatprep.subr.mxu0 0.0
      %91 = vmatpush1.msra.mxu0 0.0
      %92 = vmatprep.subr.mxu0 0.0
      %93 = vmatpush1.msra.mxu0 0.0
      %94 = vmatprep.subr.mxu0 0.0
      %95 = vmatpush1.msra.mxu0 0.0
      %96 = vmatprep.subr.mxu0 0.0
      %97 = vmatpush1.msra.mxu0 0.0
      %98 = vmatprep.subr.mxu0 0.0
      %99 = vmatpush1.msra.mxu0 0.0
      %100 = vmatprep.subr.mxu0 0.0
      %101 = vmatpush1.msra.mxu0 0.0
      %102 = vmatprep.subr.mxu0 0.0
      %103 = vmatpush1.msra.mxu0 0.0
      %104 = vmatprep.subr.mxu0 0.0
      %105 = vmatpush1.msra.mxu0 0.0
      %106 = vmatprep.subr.mxu0 0.0
      %107 = vmatpush1.msra.mxu0 0.0
      %108 = vmatprep.subr.mxu0 0.0
      %109 = vmatpush1.msra.mxu0 0.0
      %110 = vmatprep.subr.mxu0 0.0
      %111 = vmatpush1.msra.mxu0 0.0
      %112 = vmatprep.subr.mxu0 0.0
      %113 = vmatpush1.msra.mxu0 0.0
      %114 = vmatprep.subr.mxu0 0.0
      %115 = vmatpush1.msra.mxu0 0.0
      %116 = vmatprep.subr.mxu0 0.0
      %117 = vmatpush1.msra.mxu0 0.0
      %118 = vmatprep.subr.mxu0 0.0
      %119 = vmatpush1.msra.mxu0 0.0
      %120 = vmatprep.subr.mxu0 0.0
      %121 = vmatpush1.msra.mxu0 0.0
      %122 = vmatprep.subr.mxu0 0.0
      %123 = vmatpush1.msra.mxu0 0.0
      %124 = vmatprep.subr.mxu0 0.0
      %125 = vmatpush1.msra.mxu0 0.0
      %126 = vmatprep.mubr.f32.mxu0 0.0
      %127 = vmatmul.mubr.f32.gmra.mrb[0].mxu0 %v60
      %v128 = vpop.f32.mrb[0].mxu0
      %v129 = vadd.f32 0.0, %v128
      %v130 = vpop.f32.mrb[0].mxu0
      %131 = vdwg.mxu0
      %v132 = vadd.f32 %v52, %v129
      %s133 = smul.u32 %s49, 2
      %s134 = scalar_lea.vmem %s1, %s133
      %v135 = vld [vmem:[%s134] sm:$0x3]
      %s136 = scalar_lea.vmem [#allocation6], 2
      %v137 = vld [vmem:[%s136] sm:$0x3]
      %v138 = vld [vmem:[%s3] sm:$0xff]
      %v139 = vld [vmem:[%s3 + $0x8] sm:$0xff]
      %v140 = vld [vmem:[%s3 + $0x10] sm:$0xff]
      %v141 = vld [vmem:[%s3 + $0x18] sm:$0xff]
      %v143 = vsel %vm58, %v137, 0
      %145 = vmatprep.subr.mxu0 0.0
      %146 = vmatpush1.msra.mxu0 %v138
      %147 = vmatprep.subr.mxu0 0.0
      %148 = vmatpush1.msra.mxu0 %v139
      %149 = vmatprep.subr.mxu0 0.0
      %150 = vmatpush1.msra.mxu0 %v140
      %151 = vmatprep.subr.mxu0 0.0
      %152 = vmatpush1.msra.mxu0 %v141
      %153 = vmatprep.subr.mxu0 0.0
      %154 = vmatpush1.msra.mxu0 0.0
      %155 = vmatprep.subr.mxu0 0.0
      %156 = vmatpush1.msra.mxu0 0.0
      %157 = vmatprep.subr.mxu0 0.0
      %158 = vmatpush1.msra.mxu0 0.0
      %159 = vmatprep.subr.mxu0 0.0
      %160 = vmatpush1.msra.mxu0 0.0
      %161 = vmatprep.subr.mxu0 0.0
      %162 = vmatpush1.msra.mxu0 0.0
      %163 = vmatprep.subr.mxu0 0.0
      %164 = vmatpush1.msra.mxu0 0.0
      %165 = vmatprep.subr.mxu0 0.0
      %166 = vmatpush1.msra.mxu0 0.0
      %167 = vmatprep.subr.mxu0 0.0
      %168 = vmatpush1.msra.mxu0 0.0
      %169 = vmatprep.subr.mxu0 0.0
      %170 = vmatpush1.msra.mxu0 0.0
      %171 = vmatprep.subr.mxu0 0.0
      %172 = vmatpush1.msra.mxu0 0.0
      %173 = vmatprep.subr.mxu0 0.0
      %174 = vmatpush1.msra.mxu0 0.0
      %175 = vmatprep.subr.mxu0 0.0
      %176 = vmatpush1.msra.mxu0 0.0
      %177 = vmatprep.subr.mxu0 0.0
      %178 = vmatpush1.msra.mxu0 0.0
      %179 = vmatprep.subr.mxu0 0.0
      %180 = vmatpush1.msra.mxu0 0.0
      %181 = vmatprep.subr.mxu0 0.0
      %182 = vmatpush1.msra.mxu0 0.0
      %183 = vmatprep.subr.mxu0 0.0
      %184 = vmatpush1.msra.mxu0 0.0
      %185 = vmatprep.subr.mxu0 0.0
      %186 = vmatpush1.msra.mxu0 0.0
      %187 = vmatprep.subr.mxu0 0.0
      %188 = vmatpush1.msra.mxu0 0.0
      %189 = vmatprep.subr.mxu0 0.0
      %190 = vmatpush1.msra.mxu0 0.0
      %191 = vmatprep.subr.mxu0 0.0
      %192 = vmatpush1.msra.mxu0 0.0
      %193 = vmatprep.subr.mxu0 0.0
      %194 = vmatpush1.msra.mxu0 0.0
      %195 = vmatprep.subr.mxu0 0.0
      %196 = vmatpush1.msra.mxu0 0.0
      %197 = vmatprep.subr.mxu0 0.0
      %198 = vmatpush1.msra.mxu0 0.0
      %199 = vmatprep.subr.mxu0 0.0
      %200 = vmatpush1.msra.mxu0 0.0
      %201 = vmatprep.subr.mxu0 0.0
      %202 = vmatpush1.msra.mxu0 0.0
      %203 = vmatprep.subr.mxu0 0.0
      %204 = vmatpush1.msra.mxu0 0.0
      %205 = vmatprep.subr.mxu0 0.0
      %206 = vmatpush1.msra.mxu0 0.0
      %207 = vmatprep.subr.mxu0 0.0
      %208 = vmatpush1.msra.mxu0 0.0
      %209 = vmatprep.mubr.f32.mxu0 0.0
      %210 = vmatmul.mubr.f32.gmra.mrb[0].mxu0 %v143
      %v211 = vpop.f32.mrb[0].mxu0
      %v212 = vadd.f32 0.0, %v211
      %v213 = vpop.f32.mrb[0].mxu0
      %214 = vdwg.mxu0
      %v215 = vadd.f32 %v135, %v212
      %v216 = vld [vmem:[#allocation7] sm:$0x3]
      %v217 = vxor.u32 %v132, 2147483648
      %v218 = vmul.f32 %v217, 1.442695
      %v219 = vpow.pop %v218
      %v220 = vadd.f32 %v219, 1.0
      %v221 = vrcp.pop %v220
      %v222 = vmul.f32 1.0, %v221
      %v223 = vtanh.pop %v132
      %225 = vrot.lane.b32.xlu0 %v216, 32
      %v226 = vpop.permute.xlu0 %225
      %v228 = vmul.f32 %v222, %v226
      %230 = vrot.lane.b32.xlu0 %v223, 64
      %v231 = vpop.permute.xlu0 %230
      %v233 = vmul.f32 %v222, %v231
      %235 = vrot.lane.b32.xlu0 %v233, 32
      %v236 = vpop.permute.xlu0 %235
      %v238 = vadd.f32 %v228, %v236
      %v239 = vtanh.pop %v238
      %241 = vrot.lane.b32.xlu0 %v239, 64
      %v242 = vpop.permute.xlu0 %241
      %v244 = vmul.f32 %v222, %v242
      %s245 = scalar_lea.vmem [#allocation7], 2
      %v246 = vld [vmem:[%s245] sm:$0x3]
      %v247 = vxor.u32 %v215, 2147483648
      %v248 = vmul.f32 %v247, 1.442695
      %v249 = vpow.pop %v248
      %v250 = vadd.f32 %v249, 1.0
      %v251 = vrcp.pop %v250
      %v252 = vmul.f32 1.0, %v251
      %v253 = vtanh.pop %v215
      %255 = vrot.lane.b32.xlu0 %v246, 32
      %v256 = vpop.permute.xlu0 %255
      %v258 = vmul.f32 %v252, %v256
      %260 = vrot.lane.b32.xlu0 %v253, 64
      %v261 = vpop.permute.xlu0 %260
      %v263 = vmul.f32 %v252, %v261
      %265 = vrot.lane.b32.xlu0 %v263, 32
      %v266 = vpop.permute.xlu0 %265
      %v268 = vadd.f32 %v258, %v266
      %v269 = vtanh.pop %v268
      %271 = vrot.lane.b32.xlu0 %v269, 64
      %v272 = vpop.permute.xlu0 %271
      %v274 = vmul.f32 %v252, %v272
      %276 = vrot.lane.b32.xlu0 %v244, 32
      %v277 = vpop.permute.xlu0 %276
      %279 = vst.msk [vmem:[#allocation6] sm:$0x3] %vm34, %v277
      %281 = vrot.lane.b32.xlu0 %v238, 96
      %v282 = vpop.permute.xlu0 %281
      %284 = vst.msk [vmem:[#allocation7] sm:$0x3] %vm34, %v282
      %286 = vrot.lane.b32.xlu0 %v274, 32
      %v287 = vpop.permute.xlu0 %286
      %289 = vst.msk [vmem:[%s136] sm:$0x3] %vm34, %v287
      %291 = vrot.lane.b32.xlu0 %v268, 96
      %v292 = vpop.permute.xlu0 %291
      %294 = vst.msk [vmem:[%s245] sm:$0x3] %vm34, %v292
      %s295 = scalar_lea.vmem %s6, %s50
      %296 = vst.msk [vmem:[%s295] sm:$0x3] %vm34, %v277
      %s297 = scalar_lea.vmem %s7, %s133
      %298 = vst.msk [vmem:[%s297] sm:$0x3] %vm34, %v287
      %v299 = vld [vmem:[#allocation2] sm:$0x3]
      %v300 = vmax.f32 %v299, %v277
      %301 = vst.msk [vmem:[#allocation2] sm:$0x3] %vm34, %v300
      %v302 = vld [vmem:[#allocation4] sm:$0x3]
      %v303 = vmax.f32 %v302, %v287
      %304 = vst.msk [vmem:[#allocation4] sm:$0x3] %vm34, %v303
    $region30: #{_forward.5} parent=1 // loop_footer
      %s48 = sadd.s32 1, %s44
    $region31: #{_forward.5} parent=1 // loop_footer_branch
      %43 = sbr.rel target = $region27
    $region32: #{_forward.5} parent=1 // loop_exit
      _
    // Predicated region
    $region33: #{_forward.5} parent=1 // pred_check
      _
    $region34: #{_forward.5} parent=1 // pred_check_branch
      %306 = sbr.rel (0) target = $region36
    $region35: #{_forward.5} parent=1 // pred_region
      _
    $region36: #{_forward.5} parent=1 // pred_fallthru
      _
    // Predicated region
    $region37: #{_forward.5} parent=1 // pred_check
      _
    $region38: #{_forward.5} parent=1 // pred_check_branch
      %308 = sbr.rel (0) target = $region40
    $region39: #{_forward.5} parent=1 // pred_region
      _
    $region40: #{_forward.5} parent=1 // pred_fallthru
      _
    // Predicated region
    $region41: #{_forward.5} parent=1 // pred_check
      _
    $region42: #{_forward.5} parent=1 // pred_check_branch
      %310 = sbr.rel (0) target = $region44
    $region43: #{_forward.5} parent=1 // pred_region
      %s312 = ssub.s32 32, 32
      %313 = vsyncadd [#allocation3], %s312
      %s315 = sshll.u32 [#allocation2], 4
      %s316 = int_to_ptr.vmem [resolvable:$true] %s315
      %318 = dma.vmem_to_hbm [thread:$0]  %s316, 32, %s8, [#allocation3]
    $region44: #{_forward.5} parent=1 // pred_fallthru
      _
    // Predicated region
    $region45: #{_forward.5} parent=1 // pred_check
      _
    $region46: #{_forward.5} parent=1 // pred_check_branch
      %320 = sbr.rel (0) target = $region48
    $region47: #{_forward.5} parent=1 // pred_region
      %s322 = ssub.s32 32, 32
      %323 = vsyncadd [#allocation5], %s322
      %s325 = sshll.u32 [#allocation4], 4
      %s326 = int_to_ptr.vmem [resolvable:$true] %s325
      %328 = dma.vmem_to_hbm [thread:$0]  %s326, 32, %s9, [#allocation5]
    $region48: #{_forward.5} parent=1 // pred_fallthru
      _
    // Predicated region
    $region49: #{_forward.5} parent=1 // pred_check
      _
    $region50: #{_forward.5} parent=1 // pred_check_branch
      %330 = sbr.rel (0) target = $region52
    $region51: #{_forward.5} parent=1 // pred_region
      %s332 = ssub.s32 64, 64
      %333 = vsyncadd [#allocation5], %s332
      %s334 = sshll.u32 [#allocation6], 4
      %s335 = int_to_ptr.vmem [resolvable:$true] %s334
      %340 = dma.vmem_to_hbm [thread:$0]  %s335, 64, %s10, [#allocation5], 32, 32, 2
    $region52: #{_forward.5} parent=1 // pred_fallthru
      _
    // Predicated region
    $region53: #{_forward.5} parent=1 // pred_check
      _
    $region54: #{_forward.5} parent=1 // pred_check_branch
      %342 = sbr.rel (0) target = $region56
    $region55: #{_forward.5} parent=1 // pred_region
      %s344 = ssub.s32 64, 64
      %345 = vsyncadd [#allocation8], %s344
      %s346 = sshll.u32 [#allocation7], 4
      %s347 = int_to_ptr.vmem [resolvable:$true] %s346
      %352 = dma.vmem_to_hbm [thread:$0]  %s347, 64, %s11, [#allocation8], 32, 32, 2
    $region56: #{_forward.5} parent=1 // pred_fallthru
      _
    // Predicated region
    $region57: #{_forward.5} parent=1 // pred_check
      _
    $region58: #{_forward.5} parent=1 // pred_check_branch
      %354 = sbr.rel (0) target = $region60
    $region59: #{_forward.5} parent=1 // pred_region
      _
    $region60: #{_forward.5} parent=1 // pred_fallthru
      _
    // Predicated region
    $region61: #{_forward.5} parent=1 // pred_check
      _
    $region62: #{_forward.5} parent=1 // pred_check_branch
      %356 = sbr.rel (0) target = $region64
    $region63: #{_forward.5} parent=1 // pred_region
      _
    $region64: #{_forward.5} parent=1 // pred_fallthru
      _
    // Predicated region
    $region65: #{_forward.5} parent=1 // pred_check
      _
    $region66: #{_forward.5} parent=1 // pred_check_branch
      %358 = sbr.rel (0) target = $region68
    $region67: #{_forward.5} parent=1 // pred_region
      %359 = dma.done [#allocation3], 32
    $region68: #{_forward.5} parent=1 // pred_fallthru
      _
    // Predicated region
    $region69: #{_forward.5} parent=1 // pred_check
      _
    $region70: #{_forward.5} parent=1 // pred_check_branch
      %361 = sbr.rel (0) target = $region72
    $region71: #{_forward.5} parent=1 // pred_region
      %362 = dma.done [#allocation5], 32
    $region72: #{_forward.5} parent=1 // pred_fallthru
      _
    // Predicated region
    $region73: #{_forward.5} parent=1 // pred_check
      _
    $region74: #{_forward.5} parent=1 // pred_check_branch
      %364 = sbr.rel (0) target = $region76
    $region75: #{_forward.5} parent=1 // pred_region
      %365 = dma.done [#allocation5], 64
    $region76: #{_forward.5} parent=1 // pred_fallthru
      _
    // Predicated region
    $region77: #{_forward.5} parent=1 // pred_check
      _
    $region78: #{_forward.5} parent=1 // pred_check_branch
      %367 = sbr.rel (0) target = $region80
    $region79: #{_forward.5} parent=1 // pred_region
      %368 = dma.done [#allocation8], 64
    $region80: #{_forward.5} parent=1 // pred_fallthru
      _
    %369 = vsyncpa [#allocation3], 1
    %370 = vsyncpa [#allocation5], 1
    %371 = vsyncpa [#allocation8], 1

// kernel: _forward.6
$region0: #{_forward.6}
  #allocation0 [shape = 'u32[]', space=smem, size = 0x4, offset = 0x4, fixed_abs, tag = 'smem constant byte address 0x4 - core index']
  #allocation1 [shape = 'u32[144,128]{1,0:T(1,128)}', space=vmem, size = 0x12000, scoped, tag = 'internal scratch']
  %s0 = inlined_call_operand.vmem [shape: f32[8,2,128], index: 0, kind: input, shape index: {}]
  %s1 = inlined_call_operand.vmem [shape: f32[8,2,128], index: 1, kind: input, shape index: {}]
  %s2 = inlined_call_operand.vmem [shape: f32[32,128], index: 2, kind: input, shape index: {}]
  %s3 = inlined_call_operand.vmem [shape: f32[32,128], index: 3, kind: input, shape index: {}]
  %s4 = inlined_call_operand.vmem [shape: f32[2,2,32], index: 4, kind: input, shape index: {}, may-alias: {4,5}]
  %s5 = inlined_call_operand.vmem [shape: f32[2,2,32], index: 5, kind: input, shape index: {}, may-alias: {4,5}]
  %s6 = inlined_call_operand.vmem [shape: f32[8,2,32], index: 6, kind: input, shape index: {}]
  %s7 = inlined_call_operand.vmem [shape: f32[8,2,32], index: 7, kind: input, shape index: {}]
  %s8 = inlined_call_operand.vmem [shape: f32[2,32], index: 8, kind: output, shape index: {0}]
  %s9 = inlined_call_operand.vmem [shape: f32[2,32], index: 9, kind: output, shape index: {1}]
  %s10 = inlined_call_operand.hbm [shape: f32[2,2,32], index: 10, kind: output, shape index: {2}]
  %s11 = inlined_call_operand.hbm [shape: f32[2,2,32], index: 11, kind: output, shape index: {3}]
  %12 = xla_tuple %s8, %s9, %s10, %s11
  %s13 = sld [smem:[#allocation0]]
  $region73: #{_forward.6} parent=0
    _
  %s15 = ssub.s32 1, %s13
  %s16 = scalar_select 0, %s15, %s13
  $region1: #{_forward.6} parent=0
    #allocation2 [shape = 'u8[2048]{0}', space=vmem, size = 0x800, scoped, tag = 'output window, operand 2, single buffered']
    #allocation3 [shape = 's32[1]{0}', space=sflag, size = 0x4, scoped, tag = 'scoped memory for _forward.6']
    #allocation4 [shape = 'u8[2048]{0}', space=vmem, size = 0x800, scoped, tag = 'output window, operand 3, single buffered']
    #allocation5 [shape = 's32[1]{0}', space=sflag, size = 0x4, scoped, tag = 'scoped memory for _forward.6']
    %17 = vsyncpa [#allocation3], 0
    %18 = vsyncpa [#allocation5], 0
    // Predicated region
    $region2: #{_forward.6} parent=1 // pred_check
      _
    $region3: #{_forward.6} parent=1 // pred_check_branch
      %20 = sbr.rel (0) target = $region5
    $region4: #{_forward.6} parent=1 // pred_region
      _
    $region5: #{_forward.6} parent=1 // pred_fallthru
      _
    // Predicated region
    $region6: #{_forward.6} parent=1 // pred_check
      _
    $region7: #{_forward.6} parent=1 // pred_check_branch
      %22 = sbr.rel (0) target = $region9
    $region8: #{_forward.6} parent=1 // pred_region
      _
    $region9: #{_forward.6} parent=1 // pred_fallthru
      _
    // Predicated region
    $region10: #{_forward.6} parent=1 // pred_check
      _
    $region11: #{_forward.6} parent=1 // pred_check_branch
      %24 = sbr.rel (0) target = $region13
    $region12: #{_forward.6} parent=1 // pred_region
      _
    $region13: #{_forward.6} parent=1 // pred_fallthru
      _
    // Predicated region
    $region14: #{_forward.6} parent=1 // pred_check
      _
    $region15: #{_forward.6} parent=1 // pred_check_branch
      %26 = sbr.rel (0) target = $region17
    $region16: #{_forward.6} parent=1 // pred_region
      _
    $region17: #{_forward.6} parent=1 // pred_fallthru
      _
    // Predicated region
    $region18: #{_forward.6} parent=1 // pred_check
      _
    $region19: #{_forward.6} parent=1 // pred_check_branch
      %28 = sbr.rel (0) target = $region21
    $region20: #{_forward.6} parent=1 // pred_region
      _
    $region21: #{_forward.6} parent=1 // pred_fallthru
      _
    // Predicated region
    $region22: #{_forward.6} parent=1 // pred_check
      _
    $region23: #{_forward.6} parent=1 // pred_check_branch
      %30 = sbr.rel (0) target = $region25
    $region24: #{_forward.6} parent=1 // pred_region
      _
    $region25: #{_forward.6} parent=1 // pred_fallthru
      _
    // Predicated region
    $region26: #{_forward.6} parent=1 // pred_check
      _
    $region27: #{_forward.6} parent=1 // pred_check_branch
      %32 = sbr.rel (0) target = $region29
    $region28: #{_forward.6} parent=1 // pred_region
      _
    $region29: #{_forward.6} parent=1 // pred_fallthru
      _
    // Predicated region
    $region30: #{_forward.6} parent=1 // pred_check
      _
    $region31: #{_forward.6} parent=1 // pred_check_branch
      %34 = sbr.rel (0) target = $region33
    $region32: #{_forward.6} parent=1 // pred_region
      _
    $region33: #{_forward.6} parent=1 // pred_fallthru
      _
    %v35 = vld [vmem:[%s4] sm:$0x3]
    %v36 = vld [vmem:[%s4 + $0x2] sm:$0x3]
    %vm37 = vcmask 254976
    %38 = vst.msk [vmem:[#allocation2] sm:$0x3] %vm37, %v35
    %39 = vst.msk [vmem:[#allocation2 + $0x2] sm:$0x3] %vm37, %v36
    %v40 = vld [vmem:[%s5] sm:$0x3]
    %v41 = vld [vmem:[%s5 + $0x2] sm:$0x3]
    %42 = vst.msk [vmem:[#allocation4] sm:$0x3] %vm37, %v40
    %43 = vst.msk [vmem:[#allocation4 + $0x2] sm:$0x3] %vm37, %v41
    %44 = vst.msk [vmem:[%s8] sm:$0x3] %vm37, -inf
    %45 = vst.msk [vmem:[%s9] sm:$0x3] %vm37, -inf
    loop: start=0, step=1, limit=8
    $region34: #{_forward.6} parent=1 // loop_pre_header
      _
    $region35: #{_forward.6} parent=1 // loop_header
      %s47 = sphi 0, %s51
      %p48 = scmp.ge.s32.totalorder %s47, 8
    $region36: #{_forward.6} parent=1 // loop_header_branch
      %50 = sbr.rel (%p48) target = $region40
    $region37: #{_forward.6} parent=1 // loop_body
      %s52 = ssub.s32 7, %s47
      %s53 = smul.u32 %s47, 2
      %s54 = scalar_lea.vmem %s0, %s53
      %v55 = vld [vmem:[%s54] sm:$0x3]
      %v56 = vld [vmem:[#allocation2] sm:$0x3]
      %v57 = vld [vmem:[%s2] sm:$0xff]
      %v58 = vld [vmem:[%s2 + $0x8] sm:$0xff]
      %v59 = vld [vmem:[%s2 + $0x10] sm:$0xff]
      %v60 = vld [vmem:[%s2 + $0x18] sm:$0xff]
      %vm61 = vcmask 261120
      %v63 = vsel %vm61, %v56, 0
      %65 = vmatprep.subr.mxu0 0.0
      %66 = vmatpush1.msra.mxu0 %v57
      %67 = vmatprep.subr.mxu0 0.0
      %68 = vmatpush1.msra.mxu0 %v58
      %69 = vmatprep.subr.mxu0 0.0
      %70 = vmatpush1.msra.mxu0 %v59
      %71 = vmatprep.subr.mxu0 0.0
      %72 = vmatpush1.msra.mxu0 %v60
      %73 = vmatprep.subr.mxu0 0.0
      %74 = vmatpush1.msra.mxu0 0.0
      %75 = vmatprep.subr.mxu0 0.0
      %76 = vmatpush1.msra.mxu0 0.0
      %77 = vmatprep.subr.mxu0 0.0
      %78 = vmatpush1.msra.mxu0 0.0
      %79 = vmatprep.subr.mxu0 0.0
      %80 = vmatpush1.msra.mxu0 0.0
      %81 = vmatprep.subr.mxu0 0.0
      %82 = vmatpush1.msra.mxu0 0.0
      %83 = vmatprep.subr.mxu0 0.0
      %84 = vmatpush1.msra.mxu0 0.0
      %85 = vmatprep.subr.mxu0 0.0
      %86 = vmatpush1.msra.mxu0 0.0
      %87 = vmatprep.subr.mxu0 0.0
      %88 = vmatpush1.msra.mxu0 0.0
      %89 = vmatprep.subr.mxu0 0.0
      %90 = vmatpush1.msra.mxu0 0.0
      %91 = vmatprep.subr.mxu0 0.0
      %92 = vmatpush1.msra.mxu0 0.0
      %93 = vmatprep.subr.mxu0 0.0
      %94 = vmatpush1.msra.mxu0 0.0
      %95 = vmatprep.subr.mxu0 0.0
      %96 = vmatpush1.msra.mxu0 0.0
      %97 = vmatprep.subr.mxu0 0.0
      %98 = vmatpush1.msra.mxu0 0.0
      %99 = vmatprep.subr.mxu0 0.0
      %100 = vmatpush1.msra.mxu0 0.0
      %101 = vmatprep.subr.mxu0 0.0
      %102 = vmatpush1.msra.mxu0 0.0
      %103 = vmatprep.subr.mxu0 0.0
      %104 = vmatpush1.msra.mxu0 0.0
      %105 = vmatprep.subr.mxu0 0.0
      %106 = vmatpush1.msra.mxu0 0.0
      %107 = vmatprep.subr.mxu0 0.0
      %108 = vmatpush1.msra.mxu0 0.0
      %109 = vmatprep.subr.mxu0 0.0
      %110 = vmatpush1.msra.mxu0 0.0
      %111 = vmatprep.subr.mxu0 0.0
      %112 = vmatpush1.msra.mxu0 0.0
      %113 = vmatprep.subr.mxu0 0.0
      %114 = vmatpush1.msra.mxu0 0.0
      %115 = vmatprep.subr.mxu0 0.0
      %116 = vmatpush1.msra.mxu0 0.0
      %117 = vmatprep.subr.mxu0 0.0
      %118 = vmatpush1.msra.mxu0 0.0
      %119 = vmatprep.subr.mxu0 0.0
      %120 = vmatpush1.msra.mxu0 0.0
      %121 = vmatprep.subr.mxu0 0.0
      %122 = vmatpush1.msra.mxu0 0.0
      %123 = vmatprep.subr.mxu0 0.0
      %124 = vmatpush1.msra.mxu0 0.0
      %125 = vmatprep.subr.mxu0 0.0
      %126 = vmatpush1.msra.mxu0 0.0
      %127 = vmatprep.subr.mxu0 0.0
      %128 = vmatpush1.msra.mxu0 0.0
      %129 = vmatprep.mubr.f32.mxu0 0.0
      %130 = vmatmul.mubr.f32.gmra.mrb[0].mxu0 %v63
      %v131 = vpop.f32.mrb[0].mxu0
      %v132 = vadd.f32 0.0, %v131
      %v133 = vpop.f32.mrb[0].mxu0
      %134 = vdwg.mxu0
      %v135 = vadd.f32 %v55, %v132
      %s136 = smul.u32 %s52, 2
      %s137 = scalar_lea.vmem %s1, %s136
      %v138 = vld [vmem:[%s137] sm:$0x3]
      %s139 = scalar_lea.vmem [#allocation2], 2
      %v140 = vld [vmem:[%s139] sm:$0x3]
      %v141 = vld [vmem:[%s3] sm:$0xff]
      %v142 = vld [vmem:[%s3 + $0x8] sm:$0xff]
      %v143 = vld [vmem:[%s3 + $0x10] sm:$0xff]
      %v144 = vld [vmem:[%s3 + $0x18] sm:$0xff]
      %v146 = vsel %vm61, %v140, 0
      %148 = vmatprep.subr.mxu0 0.0
      %149 = vmatpush1.msra.mxu0 %v141
      %150 = vmatprep.subr.mxu0 0.0
      %151 = vmatpush1.msra.mxu0 %v142
      %152 = vmatprep.subr.mxu0 0.0
      %153 = vmatpush1.msra.mxu0 %v143
      %154 = vmatprep.subr.mxu0 0.0
      %155 = vmatpush1.msra.mxu0 %v144
      %156 = vmatprep.subr.mxu0 0.0
      %157 = vmatpush1.msra.mxu0 0.0
      %158 = vmatprep.subr.mxu0 0.0
      %159 = vmatpush1.msra.mxu0 0.0
      %160 = vmatprep.subr.mxu0 0.0
      %161 = vmatpush1.msra.mxu0 0.0
      %162 = vmatprep.subr.mxu0 0.0
      %163 = vmatpush1.msra.mxu0 0.0
      %164 = vmatprep.subr.mxu0 0.0
      %165 = vmatpush1.msra.mxu0 0.0
      %166 = vmatprep.subr.mxu0 0.0
      %167 = vmatpush1.msra.mxu0 0.0
      %168 = vmatprep.subr.mxu0 0.0
      %169 = vmatpush1.msra.mxu0 0.0
      %170 = vmatprep.subr.mxu0 0.0
      %171 = vmatpush1.msra.mxu0 0.0
      %172 = vmatprep.subr.mxu0 0.0
      %173 = vmatpush1.msra.mxu0 0.0
      %174 = vmatprep.subr.mxu0 0.0
      %175 = vmatpush1.msra.mxu0 0.0
      %176 = vmatprep.subr.mxu0 0.0
      %177 = vmatpush1.msra.mxu0 0.0
      %178 = vmatprep.subr.mxu0 0.0
      %179 = vmatpush1.msra.mxu0 0.0
      %180 = vmatprep.subr.mxu0 0.0
      %181 = vmatpush1.msra.mxu0 0.0
      %182 = vmatprep.subr.mxu0 0.0
      %183 = vmatpush1.msra.mxu0 0.0
      %184 = vmatprep.subr.mxu0 0.0
      %185 = vmatpush1.msra.mxu0 0.0
      %186 = vmatprep.subr.mxu0 0.0
      %187 = vmatpush1.msra.mxu0 0.0
      %188 = vmatprep.subr.mxu0 0.0
      %189 = vmatpush1.msra.mxu0 0.0
      %190 = vmatprep.subr.mxu0 0.0
      %191 = vmatpush1.msra.mxu0 0.0
      %192 = vmatprep.subr.mxu0 0.0
      %193 = vmatpush1.msra.mxu0 0.0
      %194 = vmatprep.subr.mxu0 0.0
      %195 = vmatpush1.msra.mxu0 0.0
      %196 = vmatprep.subr.mxu0 0.0
      %197 = vmatpush1.msra.mxu0 0.0
      %198 = vmatprep.subr.mxu0 0.0
      %199 = vmatpush1.msra.mxu0 0.0
      %200 = vmatprep.subr.mxu0 0.0
      %201 = vmatpush1.msra.mxu0 0.0
      %202 = vmatprep.subr.mxu0 0.0
      %203 = vmatpush1.msra.mxu0 0.0
      %204 = vmatprep.subr.mxu0 0.0
      %205 = vmatpush1.msra.mxu0 0.0
      %206 = vmatprep.subr.mxu0 0.0
      %207 = vmatpush1.msra.mxu0 0.0
      %208 = vmatprep.subr.mxu0 0.0
      %209 = vmatpush1.msra.mxu0 0.0
      %210 = vmatprep.subr.mxu0 0.0
      %211 = vmatpush1.msra.mxu0 0.0
      %212 = vmatprep.mubr.f32.mxu0 0.0
      %213 = vmatmul.mubr.f32.gmra.mrb[0].mxu0 %v146
      %v214 = vpop.f32.mrb[0].mxu0
      %v215 = vadd.f32 0.0, %v214
      %v216 = vpop.f32.mrb[0].mxu0
      %217 = vdwg.mxu0
      %v218 = vadd.f32 %v138, %v215
      %v219 = vld [vmem:[#allocation4] sm:$0x3]
      %v220 = vxor.u32 %v135, 2147483648
      %v221 = vmul.f32 %v220, 1.442695
      %v222 = vpow.pop %v221
      %v223 = vadd.f32 %v222, 1.0
      %v224 = vrcp.pop %v223
      %v225 = vmul.f32 1.0, %v224
      %v226 = vtanh.pop %v135
      %228 = vrot.lane.b32.xlu0 %v219, 32
      %v229 = vpop.permute.xlu0 %228
      %v231 = vmul.f32 %v225, %v229
      %233 = vrot.lane.b32.xlu0 %v226, 64
      %v234 = vpop.permute.xlu0 %233
      %v236 = vmul.f32 %v225, %v234
      %238 = vrot.lane.b32.xlu0 %v236, 32
      %v239 = vpop.permute.xlu0 %238
      %v241 = vadd.f32 %v231, %v239
      %v242 = vtanh.pop %v241
      %244 = vrot.lane.b32.xlu0 %v242, 64
      %v245 = vpop.permute.xlu0 %244
      %v247 = vmul.f32 %v225, %v245
      %s248 = scalar_lea.vmem [#allocation4], 2
      %v249 = vld [vmem:[%s248] sm:$0x3]
      %v250 = vxor.u32 %v218, 2147483648
      %v251 = vmul.f32 %v250, 1.442695
      %v252 = vpow.pop %v251
      %v253 = vadd.f32 %v252, 1.0
      %v254 = vrcp.pop %v253
      %v255 = vmul.f32 1.0, %v254
      %v256 = vtanh.pop %v218
      %258 = vrot.lane.b32.xlu0 %v249, 32
      %v259 = vpop.permute.xlu0 %258
      %v261 = vmul.f32 %v255, %v259
      %263 = vrot.lane.b32.xlu0 %v256, 64
      %v264 = vpop.permute.xlu0 %263
      %v266 = vmul.f32 %v255, %v264
      %268 = vrot.lane.b32.xlu0 %v266, 32
      %v269 = vpop.permute.xlu0 %268
      %v271 = vadd.f32 %v261, %v269
      %v272 = vtanh.pop %v271
      %274 = vrot.lane.b32.xlu0 %v272, 64
      %v275 = vpop.permute.xlu0 %274
      %v277 = vmul.f32 %v255, %v275
      %279 = vrot.lane.b32.xlu0 %v247, 32
      %v280 = vpop.permute.xlu0 %279
      %282 = vst.msk [vmem:[#allocation2] sm:$0x3] %vm37, %v280
      %284 = vrot.lane.b32.xlu0 %v241, 96
      %v285 = vpop.permute.xlu0 %284
      %287 = vst.msk [vmem:[#allocation4] sm:$0x3] %vm37, %v285
      %289 = vrot.lane.b32.xlu0 %v277, 32
      %v290 = vpop.permute.xlu0 %289
      %292 = vst.msk [vmem:[%s139] sm:$0x3] %vm37, %v290
      %294 = vrot.lane.b32.xlu0 %v271, 96
      %v295 = vpop.permute.xlu0 %294
      %297 = vst.msk [vmem:[%s248] sm:$0x3] %vm37, %v295
      %v298 = vld [vmem:[%s8] sm:$0x3]
      %s299 = scalar_lea.vmem %s6, %s53
      %v300 = vld [vmem:[%s299] sm:$0x3]
      %v301 = vadd.f32 %v300, %v280
      %v302 = vmax.f32 %v298, %v301
      %303 = vst.msk [vmem:[%s8] sm:$0x3] %vm37, %v302
      %v304 = vld [vmem:[%s9] sm:$0x3]
      %s305 = scalar_lea.vmem %s7, %s136
      %v306 = vld [vmem:[%s305] sm:$0x3]
      %v307 = vadd.f32 %v306, %v290
      %v308 = vmax.f32 %v304, %v307
      %309 = vst.msk [vmem:[%s9] sm:$0x3] %vm37, %v308
    $region38: #{_forward.6} parent=1 // loop_footer
      %s51 = sadd.s32 1, %s47
    $region39: #{_forward.6} parent=1 // loop_footer_branch
      %46 = sbr.rel target = $region35
    $region40: #{_forward.6} parent=1 // loop_exit
      _
    // Predicated region
    $region41: #{_forward.6} parent=1 // pred_check
      _
    $region42: #{_forward.6} parent=1 // pred_check_branch
      %311 = sbr.rel (0) target = $region44
    $region43: #{_forward.6} parent=1 // pred_region
      _
    $region44: #{_forward.6} parent=1 // pred_fallthru
      _
    // Predicated region
    $region45: #{_forward.6} parent=1 // pred_check
      _
    $region46: #{_forward.6} parent=1 // pred_check_branch
      %313 = sbr.rel (0) target = $region48
    $region47: #{_forward.6} parent=1 // pred_region
      _
    $region48: #{_forward.6} parent=1 // pred_fallthru
      _
    // Predicated region
    $region49: #{_forward.6} parent=1 // pred_check
      _
    $region50: #{_forward.6} parent=1 // pred_check_branch
      %315 = sbr.rel (0) target = $region52
    $region51: #{_forward.6} parent=1 // pred_region
      %s317 = ssub.s32 64, 64
      %318 = vsyncadd [#allocation3], %s317
      %s319 = sshll.u32 [#allocation2], 4
      %s320 = int_to_ptr.vmem [resolvable:$true] %s319
      %325 = dma.vmem_to_hbm [thread:$0]  %s320, 64, %s10, [#allocation3], 32, 32, 2
    $region52: #{_forward.6} parent=1 // pred_fallthru
      _
    // Predicated region
    $region53: #{_forward.6} parent=1 // pred_check
      _
    $region54: #{_forward.6} parent=1 // pred_check_branch
      %327 = sbr.rel (0) target = $region56
    $region55: #{_forward.6} parent=1 // pred_region
      %s329 = ssub.s32 64, 64
      %330 = vsyncadd [#allocation5], %s329
      %s331 = sshll.u32 [#allocation4], 4
      %s332 = int_to_ptr.vmem [resolvable:$true] %s331
      %337 = dma.vmem_to_hbm [thread:$0]  %s332, 64, %s11, [#allocation5], 32, 32, 2
    $region56: #{_forward.6} parent=1 // pred_fallthru
      _
    // Predicated region
    $region57: #{_forward.6} parent=1 // pred_check
      _
    $region58: #{_forward.6} parent=1 // pred_check_branch
      %339 = sbr.rel (0) target = $region60
    $region59: #{_forward.6} parent=1 // pred_region
      _
    $region60: #{_forward.6} parent=1 // pred_fallthru
      _
    // Predicated region
    $region61: #{_forward.6} parent=1 // pred_check
      _
    $region62: #{_forward.6} parent=1 // pred_check_branch
      %341 = sbr.rel (0) target = $region64
    $region63: #{_forward.6} parent=1 // pred_region
      _
    $region64: #{_forward.6} parent=1 // pred_fallthru
      _
    // Predicated region
    $region65: #{_forward.6} parent=1 // pred_check
      _
    $region66: #{_forward.6} parent=1 // pred_check_branch
      %343 = sbr.rel (0) target = $region68
    $region67: #{_forward.6} parent=1 // pred_region
      %344 = dma.done [#allocation3], 64
    $region68: #{_forward.6} parent=1 // pred_fallthru
      _
    // Predicated region
    $region69: #{_forward.6} parent=1 // pred_check
      _
    $region70: #{_forward.6} parent=1 // pred_check_branch
      %346 = sbr.rel (0) target = $region72
    $region71: #{_forward.6} parent=1 // pred_region
      %347 = dma.done [#allocation5], 64
    $region72: #{_forward.6} parent=1 // pred_fallthru
      _
    %348 = vsyncpa [#allocation3], 1
    %349 = vsyncpa [#allocation5], 1

// kernel: _forward.7
$region0: #{_forward.7}
  #allocation0 [shape = 'u32[]', space=smem, size = 0x4, offset = 0x4, fixed_abs, tag = 'smem constant byte address 0x4 - core index']
  #allocation1 [shape = 'u32[144,128]{1,0:T(1,128)}', space=vmem, size = 0x12000, scoped, tag = 'internal scratch']
  %s0 = inlined_call_operand.vmem [shape: f32[6,2,128], index: 0, kind: input, shape index: {}]
  %s1 = inlined_call_operand.vmem [shape: f32[6,2,128], index: 1, kind: input, shape index: {}]
  %s2 = inlined_call_operand.vmem [shape: f32[32,128], index: 2, kind: input, shape index: {}]
  %s3 = inlined_call_operand.vmem [shape: f32[32,128], index: 3, kind: input, shape index: {}]
  %s4 = inlined_call_operand.vmem [shape: f32[2,2,32], index: 4, kind: input, shape index: {}, may-alias: {4,5}]
  %s5 = inlined_call_operand.vmem [shape: f32[2,2,32], index: 5, kind: input, shape index: {}, may-alias: {4,5}]
  %s6 = inlined_call_operand.vmem [shape: f32[2,32], index: 6, kind: output, shape index: {0}]
  %s7 = inlined_call_operand.vmem [shape: f32[2,32], index: 7, kind: output, shape index: {1}]
  %s8 = inlined_call_operand.vmem [shape: f32[2,2,32], index: 8, kind: output, shape index: {2}]
  %s9 = inlined_call_operand.vmem [shape: f32[2,2,32], index: 9, kind: output, shape index: {3}]
  %10 = xla_tuple %s6, %s7, %s8, %s9
  %s11 = sld [smem:[#allocation0]]
  $region65: #{_forward.7} parent=0
    _
  %s13 = ssub.s32 1, %s11
  %s14 = scalar_select 0, %s13, %s11
  // Predicated region
  $region2: #{_forward.7} parent=0 // pred_check
    _
  $region3: #{_forward.7} parent=0 // pred_check_branch
    %16 = sbr.rel (0) target = $region5
  $region4: #{_forward.7} parent=0 // pred_region
    _
  $region5: #{_forward.7} parent=0 // pred_fallthru
    _
  // Predicated region
  $region6: #{_forward.7} parent=0 // pred_check
    _
  $region7: #{_forward.7} parent=0 // pred_check_branch
    %18 = sbr.rel (0) target = $region9
  $region8: #{_forward.7} parent=0 // pred_region
    _
  $region9: #{_forward.7} parent=0 // pred_fallthru
    _
  // Predicated region
  $region10: #{_forward.7} parent=0 // pred_check
    _
  $region11: #{_forward.7} parent=0 // pred_check_branch
    %20 = sbr.rel (0) target = $region13
  $region12: #{_forward.7} parent=0 // pred_region
    _
  $region13: #{_forward.7} parent=0 // pred_fallthru
    _
  // Predicated region
  $region14: #{_forward.7} parent=0 // pred_check
    _
  $region15: #{_forward.7} parent=0 // pred_check_branch
    %22 = sbr.rel (0) target = $region17
  $region16: #{_forward.7} parent=0 // pred_region
    _
  $region17: #{_forward.7} parent=0 // pred_fallthru
    _
  // Predicated region
  $region18: #{_forward.7} parent=0 // pred_check
    _
  $region19: #{_forward.7} parent=0 // pred_check_branch
    %24 = sbr.rel (0) target = $region21
  $region20: #{_forward.7} parent=0 // pred_region
    _
  $region21: #{_forward.7} parent=0 // pred_fallthru
    _
  // Predicated region
  $region22: #{_forward.7} parent=0 // pred_check
    _
  $region23: #{_forward.7} parent=0 // pred_check_branch
    %26 = sbr.rel (0) target = $region25
  $region24: #{_forward.7} parent=0 // pred_region
    _
  $region25: #{_forward.7} parent=0 // pred_fallthru
    _
  %v27 = vld [vmem:[%s4] sm:$0x3]
  %v28 = vld [vmem:[%s4 + $0x2] sm:$0x3]
  %vm29 = vcmask 254976
  %30 = vst.msk [vmem:[%s8] sm:$0x3] %vm29, %v27
  %31 = vst.msk [vmem:[%s8 + $0x2] sm:$0x3] %vm29, %v28
  %v32 = vld [vmem:[%s5] sm:$0x3]
  %v33 = vld [vmem:[%s5 + $0x2] sm:$0x3]
  %34 = vst.msk [vmem:[%s9] sm:$0x3] %vm29, %v32
  %35 = vst.msk [vmem:[%s9 + $0x2] sm:$0x3] %vm29, %v33
  %36 = vst.msk [vmem:[%s6] sm:$0x3] %vm29, -inf
  %37 = vst.msk [vmem:[%s7] sm:$0x3] %vm29, -inf
  loop: start=0, step=1, limit=6
  $region26: #{_forward.7} parent=0 // loop_pre_header
    _
  $region27: #{_forward.7} parent=0 // loop_header
    %s39 = sphi 0, %s43
    %p40 = scmp.ge.s32.totalorder %s39, 6
  $region28: #{_forward.7} parent=0 // loop_header_branch
    %42 = sbr.rel (%p40) target = $region32
  $region29: #{_forward.7} parent=0 // loop_body
    %s44 = ssub.s32 5, %s39
    %s45 = smul.u32 %s39, 2
    %s46 = scalar_lea.vmem %s0, %s45
    %v47 = vld [vmem:[%s46] sm:$0x3]
    %v48 = vld [vmem:[%s8] sm:$0x3]
    %v49 = vld [vmem:[%s2] sm:$0xff]
    %v50 = vld [vmem:[%s2 + $0x8] sm:$0xff]
    %v51 = vld [vmem:[%s2 + $0x10] sm:$0xff]
    %v52 = vld [vmem:[%s2 + $0x18] sm:$0xff]
    %vm53 = vcmask 261120
    %v55 = vsel %vm53, %v48, 0
    %57 = vmatprep.subr.mxu0 0.0
    %58 = vmatpush1.msra.mxu0 %v49
    %59 = vmatprep.subr.mxu0 0.0
    %60 = vmatpush1.msra.mxu0 %v50
    %61 = vmatprep.subr.mxu0 0.0
    %62 = vmatpush1.msra.mxu0 %v51
    %63 = vmatprep.subr.mxu0 0.0
    %64 = vmatpush1.msra.mxu0 %v52
    %65 = vmatprep.subr.mxu0 0.0
    %66 = vmatpush1.msra.mxu0 0.0
    %67 = vmatprep.subr.mxu0 0.0
    %68 = vmatpush1.msra.mxu0 0.0
    %69 = vmatprep.subr.mxu0 0.0
    %70 = vmatpush1.msra.mxu0 0.0
    %71 = vmatprep.subr.mxu0 0.0
    %72 = vmatpush1.msra.mxu0 0.0
    %73 = vmatprep.subr.mxu0 0.0
    %74 = vmatpush1.msra.mxu0 0.0
    %75 = vmatprep.subr.mxu0 0.0
    %76 = vmatpush1.msra.mxu0 0.0
    %77 = vmatprep.subr.mxu0 0.0
    %78 = vmatpush1.msra.mxu0 0.0
    %79 = vmatprep.subr.mxu0 0.0
    %80 = vmatpush1.msra.mxu0 0.0
    %81 = vmatprep.subr.mxu0 0.0
    %82 = vmatpush1.msra.mxu0 0.0
    %83 = vmatprep.subr.mxu0 0.0
    %84 = vmatpush1.msra.mxu0 0.0
    %85 = vmatprep.subr.mxu0 0.0
    %86 = vmatpush1.msra.mxu0 0.0
    %87 = vmatprep.subr.mxu0 0.0
    %88 = vmatpush1.msra.mxu0 0.0
    %89 = vmatprep.subr.mxu0 0.0
    %90 = vmatpush1.msra.mxu0 0.0
    %91 = vmatprep.subr.mxu0 0.0
    %92 = vmatpush1.msra.mxu0 0.0
    %93 = vmatprep.subr.mxu0 0.0
    %94 = vmatpush1.msra.mxu0 0.0
    %95 = vmatprep.subr.mxu0 0.0
    %96 = vmatpush1.msra.mxu0 0.0
    %97 = vmatprep.subr.mxu0 0.0
    %98 = vmatpush1.msra.mxu0 0.0
    %99 = vmatprep.subr.mxu0 0.0
    %100 = vmatpush1.msra.mxu0 0.0
    %101 = vmatprep.subr.mxu0 0.0
    %102 = vmatpush1.msra.mxu0 0.0
    %103 = vmatprep.subr.mxu0 0.0
    %104 = vmatpush1.msra.mxu0 0.0
    %105 = vmatprep.subr.mxu0 0.0
    %106 = vmatpush1.msra.mxu0 0.0
    %107 = vmatprep.subr.mxu0 0.0
    %108 = vmatpush1.msra.mxu0 0.0
    %109 = vmatprep.subr.mxu0 0.0
    %110 = vmatpush1.msra.mxu0 0.0
    %111 = vmatprep.subr.mxu0 0.0
    %112 = vmatpush1.msra.mxu0 0.0
    %113 = vmatprep.subr.mxu0 0.0
    %114 = vmatpush1.msra.mxu0 0.0
    %115 = vmatprep.subr.mxu0 0.0
    %116 = vmatpush1.msra.mxu0 0.0
    %117 = vmatprep.subr.mxu0 0.0
    %118 = vmatpush1.msra.mxu0 0.0
    %119 = vmatprep.subr.mxu0 0.0
    %120 = vmatpush1.msra.mxu0 0.0
    %121 = vmatprep.mubr.f32.mxu0 0.0
    %122 = vmatmul.mubr.f32.gmra.mrb[0].mxu0 %v55
    %v123 = vpop.f32.mrb[0].mxu0
    %v124 = vadd.f32 0.0, %v123
    %v125 = vpop.f32.mrb[0].mxu0
    %126 = vdwg.mxu0
    %v127 = vadd.f32 %v47, %v124
    %s128 = smul.u32 %s44, 2
    %s129 = scalar_lea.vmem %s1, %s128
    %v130 = vld [vmem:[%s129] sm:$0x3]
    %s131 = scalar_lea.vmem %s8, 2
    %v132 = vld [vmem:[%s131] sm:$0x3]
    %v133 = vld [vmem:[%s3] sm:$0xff]
    %v134 = vld [vmem:[%s3 + $0x8] sm:$0xff]
    %v135 = vld [vmem:[%s3 + $0x10] sm:$0xff]
    %v136 = vld [vmem:[%s3 + $0x18] sm:$0xff]
    %v138 = vsel %vm53, %v132, 0
    %140 = vmatprep.subr.mxu0 0.0
    %141 = vmatpush1.msra.mxu0 %v133
    %142 = vmatprep.subr.mxu0 0.0
    %143 = vmatpush1.msra.mxu0 %v134
    %144 = vmatprep.subr.mxu0 0.0
    %145 = vmatpush1.msra.mxu0 %v135
    %146 = vmatprep.subr.mxu0 0.0
    %147 = vmatpush1.msra.mxu0 %v136
    %148 = vmatprep.subr.mxu0 0.0
    %149 = vmatpush1.msra.mxu0 0.0
    %150 = vmatprep.subr.mxu0 0.0
    %151 = vmatpush1.msra.mxu0 0.0
    %152 = vmatprep.subr.mxu0 0.0
    %153 = vmatpush1.msra.mxu0 0.0
    %154 = vmatprep.subr.mxu0 0.0
    %155 = vmatpush1.msra.mxu0 0.0
    %156 = vmatprep.subr.mxu0 0.0
    %157 = vmatpush1.msra.mxu0 0.0
    %158 = vmatprep.subr.mxu0 0.0
    %159 = vmatpush1.msra.mxu0 0.0
    %160 = vmatprep.subr.mxu0 0.0
    %161 = vmatpush1.msra.mxu0 0.0
    %162 = vmatprep.subr.mxu0 0.0
    %163 = vmatpush1.msra.mxu0 0.0
    %164 = vmatprep.subr.mxu0 0.0
    %165 = vmatpush1.msra.mxu0 0.0
    %166 = vmatprep.subr.mxu0 0.0
    %167 = vmatpush1.msra.mxu0 0.0
    %168 = vmatprep.subr.mxu0 0.0
    %169 = vmatpush1.msra.mxu0 0.0
    %170 = vmatprep.subr.mxu0 0.0
    %171 = vmatpush1.msra.mxu0 0.0
    %172 = vmatprep.subr.mxu0 0.0
    %173 = vmatpush1.msra.mxu0 0.0
    %174 = vmatprep.subr.mxu0 0.0
    %175 = vmatpush1.msra.mxu0 0.0
    %176 = vmatprep.subr.mxu0 0.0
    %177 = vmatpush1.msra.mxu0 0.0
    %178 = vmatprep.subr.mxu0 0.0
    %179 = vmatpush1.msra.mxu0 0.0
    %180 = vmatprep.subr.mxu0 0.0
    %181 = vmatpush1.msra.mxu0 0.0
    %182 = vmatprep.subr.mxu0 0.0
    %183 = vmatpush1.msra.mxu0 0.0
    %184 = vmatprep.subr.mxu0 0.0
    %185 = vmatpush1.msra.mxu0 0.0
    %186 = vmatprep.subr.mxu0 0.0
    %187 = vmatpush1.msra.mxu0 0.0
    %188 = vmatprep.subr.mxu0 0.0
    %189 = vmatpush1.msra.mxu0 0.0
    %190 = vmatprep.subr.mxu0 0.0
    %191 = vmatpush1.msra.mxu0 0.0
    %192 = vmatprep.subr.mxu0 0.0
    %193 = vmatpush1.msra.mxu0 0.0
    %194 = vmatprep.subr.mxu0 0.0
    %195 = vmatpush1.msra.mxu0 0.0
    %196 = vmatprep.subr.mxu0 0.0
    %197 = vmatpush1.msra.mxu0 0.0
    %198 = vmatprep.subr.mxu0 0.0
    %199 = vmatpush1.msra.mxu0 0.0
    %200 = vmatprep.subr.mxu0 0.0
    %201 = vmatpush1.msra.mxu0 0.0
    %202 = vmatprep.subr.mxu0 0.0
    %203 = vmatpush1.msra.mxu0 0.0
    %204 = vmatprep.mubr.f32.mxu0 0.0
    %205 = vmatmul.mubr.f32.gmra.mrb[0].mxu0 %v138
    %v206 = vpop.f32.mrb[0].mxu0
    %v207 = vadd.f32 0.0, %v206
    %v208 = vpop.f32.mrb[0].mxu0
    %209 = vdwg.mxu0
    %v210 = vadd.f32 %v130, %v207
    %v211 = vld [vmem:[%s9] sm:$0x3]
    %v212 = vxor.u32 %v127, 2147483648
    %v213 = vmul.f32 %v212, 1.442695
    %v214 = vpow.pop %v213
    %v215 = vadd.f32 %v214, 1.0
    %v216 = vrcp.pop %v215
    %v217 = vmul.f32 1.0, %v216
    %v218 = vtanh.pop %v127
    %220 = vrot.lane.b32.xlu0 %v211, 32
    %v221 = vpop.permute.xlu0 %220
    %v223 = vmul.f32 %v217, %v221
    %225 = vrot.lane.b32.xlu0 %v218, 64
    %v226 = vpop.permute.xlu0 %225
    %v228 = vmul.f32 %v217, %v226
    %230 = vrot.lane.b32.xlu0 %v228, 32
    %v231 = vpop.permute.xlu0 %230
    %v233 = vadd.f32 %v223, %v231
    %v234 = vtanh.pop %v233
    %236 = vrot.lane.b32.xlu0 %v234, 64
    %v237 = vpop.permute.xlu0 %236
    %v239 = vmul.f32 %v217, %v237
    %s240 = scalar_lea.vmem %s9, 2
    %v241 = vld [vmem:[%s240] sm:$0x3]
    %v242 = vxor.u32 %v210, 2147483648
    %v243 = vmul.f32 %v242, 1.442695
    %v244 = vpow.pop %v243
    %v245 = vadd.f32 %v244, 1.0
    %v246 = vrcp.pop %v245
    %v247 = vmul.f32 1.0, %v246
    %v248 = vtanh.pop %v210
    %250 = vrot.lane.b32.xlu0 %v241, 32
    %v251 = vpop.permute.xlu0 %250
    %v253 = vmul.f32 %v247, %v251
    %255 = vrot.lane.b32.xlu0 %v248, 64
    %v256 = vpop.permute.xlu0 %255
    %v258 = vmul.f32 %v247, %v256
    %260 = vrot.lane.b32.xlu0 %v258, 32
    %v261 = vpop.permute.xlu0 %260
    %v263 = vadd.f32 %v253, %v261
    %v264 = vtanh.pop %v263
    %266 = vrot.lane.b32.xlu0 %v264, 64
    %v267 = vpop.permute.xlu0 %266
    %v269 = vmul.f32 %v247, %v267
    %271 = vrot.lane.b32.xlu0 %v239, 32
    %v272 = vpop.permute.xlu0 %271
    %274 = vst.msk [vmem:[%s8] sm:$0x3] %vm29, %v272
    %276 = vrot.lane.b32.xlu0 %v233, 96
    %v277 = vpop.permute.xlu0 %276
    %279 = vst.msk [vmem:[%s9] sm:$0x3] %vm29, %v277
    %281 = vrot.lane.b32.xlu0 %v269, 32
    %v282 = vpop.permute.xlu0 %281
    %284 = vst.msk [vmem:[%s131] sm:$0x3] %vm29, %v282
    %286 = vrot.lane.b32.xlu0 %v263, 96
    %v287 = vpop.permute.xlu0 %286
    %289 = vst.msk [vmem:[%s240] sm:$0x3] %vm29, %v287
    %v290 = vld [vmem:[%s6] sm:$0x3]
    %v291 = vmax.f32 %v290, %v272
    %292 = vst.msk [vmem:[%s6] sm:$0x3] %vm29, %v291
    %v293 = vld [vmem:[%s7] sm:$0x3]
    %v294 = vmax.f32 %v293, %v282
    %295 = vst.msk [vmem:[%s7] sm:$0x3] %vm29, %v294
  $region30: #{_forward.7} parent=0 // loop_footer
    %s43 = sadd.s32 1, %s39
  $region31: #{_forward.7} parent=0 // loop_footer_branch
    %38 = sbr.rel target = $region27
  $region32: #{_forward.7} parent=0 // loop_exit
    _
  // Predicated region
  $region33: #{_forward.7} parent=0 // pred_check
    _
  $region34: #{_forward.7} parent=0 // pred_check_branch
    %297 = sbr.rel (0) target = $region36
  $region35: #{_forward.7} parent=0 // pred_region
    _
  $region36: #{_forward.7} parent=0 // pred_fallthru
    _
  // Predicated region
  $region37: #{_forward.7} parent=0 // pred_check
    _
  $region38: #{_forward.7} parent=0 // pred_check_branch
    %299 = sbr.rel (0) target = $region40
  $region39: #{_forward.7} parent=0 // pred_region
    _
  $region40: #{_forward.7} parent=0 // pred_fallthru
    _
  // Predicated region
  $region41: #{_forward.7} parent=0 // pred_check
    _
  $region42: #{_forward.7} parent=0 // pred_check_branch
    %301 = sbr.rel (0) target = $region44
  $region43: #{_forward.7} parent=0 // pred_region
    _
  $region44: #{_forward.7} parent=0 // pred_fallthru
    _
  // Predicated region
  $region45: #{_forward.7} parent=0 // pred_check
    _
  $region46: #{_forward.7} parent=0 // pred_check_branch
    %303 = sbr.rel (0) target = $region48
  $region47: #{_forward.7} parent=0 // pred_region
    _
  $region48: #{_forward.7} parent=0 // pred_fallthru
    _
  // Predicated region
  $region49: #{_forward.7} parent=0 // pred_check
    _
  $region50: #{_forward.7} parent=0 // pred_check_branch
    %305 = sbr.rel (0) target = $region52
  $region51: #{_forward.7} parent=0 // pred_region
    _
  $region52: #{_forward.7} parent=0 // pred_fallthru
    _
  // Predicated region
  $region53: #{_forward.7} parent=0 // pred_check
    _
  $region54: #{_forward.7} parent=0 // pred_check_branch
    %307 = sbr.rel (0) target = $region56
  $region55: #{_forward.7} parent=0 // pred_region
    _
  $region56: #{_forward.7} parent=0 // pred_fallthru
    _
  // Predicated region
  $region57: #{_forward.7} parent=0 // pred_check
    _
  $region58: #{_forward.7} parent=0 // pred_check_branch
    %309 = sbr.rel (0) target = $region60
  $region59: #{_forward.7} parent=0 // pred_region
    _
  $region60: #{_forward.7} parent=0 // pred_fallthru
    _
  // Predicated region
  $region61: #{_forward.7} parent=0 // pred_check
    _
  $region62: #{_forward.7} parent=0 // pred_check_branch
    %311 = sbr.rel (0) target = $region64
  $region63: #{_forward.7} parent=0 // pred_region
    _
  $region64: #{_forward.7} parent=0 // pred_fallthru
    _

// kernel: _forward.9
$region0: #{_forward.9}
  #allocation0 [shape = 'u32[]', space=smem, size = 0x4, offset = 0x4, fixed_abs, tag = 'smem constant byte address 0x4 - core index']
  #allocation1 [shape = 'u32[144,128]{1,0:T(1,128)}', space=vmem, size = 0x12000, scoped, tag = 'internal scratch']
  %s0 = inlined_call_operand.vmem [shape: f32[2,32], index: 0, kind: input, shape index: {}]
  %s1 = inlined_call_operand.vmem [shape: f32[2,32], index: 1, kind: input, shape index: {}]
  %s2 = inlined_call_operand.vmem [shape: f32[2,32], index: 2, kind: input, shape index: {}]
  %s3 = inlined_call_operand.vmem [shape: f32[2,32], index: 3, kind: input, shape index: {}]
  %s4 = inlined_call_operand.vmem [shape: f32[2,32], index: 4, kind: input, shape index: {}]
  %s5 = inlined_call_operand.vmem [shape: f32[2,32], index: 5, kind: input, shape index: {}]
  %s6 = inlined_call_operand.vmem [shape: f32[2,1], index: 6, kind: output, shape index: {}]
  %s7 = sld [smem:[#allocation0]]
  $region34: #{_forward.9} parent=0
    _
  %s9 = ssub.s32 1, %s7
  %s10 = scalar_select 0, %s9, %s7
  // Predicated region
  $region2: #{_forward.9} parent=0 // pred_check
    _
  $region3: #{_forward.9} parent=0 // pred_check_branch
    %12 = sbr.rel (0) target = $region5
  $region4: #{_forward.9} parent=0 // pred_region
    _
  $region5: #{_forward.9} parent=0 // pred_fallthru
    _
  // Predicated region
  $region6: #{_forward.9} parent=0 // pred_check
    _
  $region7: #{_forward.9} parent=0 // pred_check_branch
    %14 = sbr.rel (0) target = $region9
  $region8: #{_forward.9} parent=0 // pred_region
    _
  $region9: #{_forward.9} parent=0 // pred_fallthru
    _
  // Predicated region
  $region10: #{_forward.9} parent=0 // pred_check
    _
  $region11: #{_forward.9} parent=0 // pred_check_branch
    %16 = sbr.rel (0) target = $region13
  $region12: #{_forward.9} parent=0 // pred_region
    _
  $region13: #{_forward.9} parent=0 // pred_fallthru
    _
  // Predicated region
  $region14: #{_forward.9} parent=0 // pred_check
    _
  $region15: #{_forward.9} parent=0 // pred_check_branch
    %18 = sbr.rel (0) target = $region17
  $region16: #{_forward.9} parent=0 // pred_region
    _
  $region17: #{_forward.9} parent=0 // pred_fallthru
    _
  // Predicated region
  $region18: #{_forward.9} parent=0 // pred_check
    _
  $region19: #{_forward.9} parent=0 // pred_check_branch
    %20 = sbr.rel (0) target = $region21
  $region20: #{_forward.9} parent=0 // pred_region
    _
  $region21: #{_forward.9} parent=0 // pred_fallthru
    _
  // Predicated region
  $region22: #{_forward.9} parent=0 // pred_check
    _
  $region23: #{_forward.9} parent=0 // pred_check_branch
    %22 = sbr.rel (0) target = $region25
  $region24: #{_forward.9} parent=0 // pred_region
    _
  $region25: #{_forward.9} parent=0 // pred_fallthru
    _
  %v23 = vld [vmem:[%s0] sm:$0x3]
  %v24 = vld [vmem:[%s1] sm:$0x3]
  %v25 = vld [vmem:[%s2] sm:$0x3]
  %v26 = vld [vmem:[%s4] sm:$0x3]
  %v27 = vmax.f32 %v25, %v26
  %v28 = vld [vmem:[%s3] sm:$0x3]
  %v29 = vld [vmem:[%s5] sm:$0x3]
  %v30 = vmax.f32 %v28, %v29
  %v31 = vmul.f32 %v23, %v27
  %v32 = vmul.f32 %v24, %v30
  %v33 = vadd.f32 %v31, %v32
  %vm34 = vcmask 254976
  %v35 = vsel %vm34, %v33, 0.0
  %36 = vadd.xlane.f32.xlu0 %v35
  %v37 = vpop.xlane.xlu0 %36
  %v38 = vmul.f32 %v23, %v23
  %v39 = vmul.f32 %v24, %v24
  %v40 = vadd.f32 %v38, %v39
  %v41 = vsel %vm34, %v40, 0.0
  %42 = vadd.xlane.f32.xlu0 %v41
  %v43 = vpop.xlane.xlu0 %42
  %v44 = vmul.f32 %v27, %v27
  %v45 = vmul.f32 %v30, %v30
  %v46 = vadd.f32 %v44, %v45
  %v47 = vsel %vm34, %v46, 0.0
  %48 = vadd.xlane.f32.xlu0 %v47
  %v49 = vpop.xlane.xlu0 %48
  %v50 = vmul.f32 %v43, %v49
  %v51 = vrsqrt.pop %v50
  %v52 = vmul.f32 %v50, %v51
  %vm53 = vcmp.eq.f32.partialorder %v50, inf
  %v54 = vsel %vm53, %v50, %v52
  %vm55 = vcmp.eq.f32.partialorder %v50, 0.0
  %v56 = vand.u32 %v50, 2147483648
  %v57 = vsel %vm55, %v56, %v54
  %v58 = vmax.f32 %v57, 1e-08
  %v59 = vrcp.pop %v58
  %v60 = vmul.f32 %v37, %v59
  %vm61 = vcmask 1024
  %62 = vst.msk [vmem:[%s6] sm:$0x3] %vm61, %v60
  // Predicated region
  $region26: #{_forward.9} parent=0 // pred_check
    _
  $region27: #{_forward.9} parent=0 // pred_check_branch
    %64 = sbr.rel (0) target = $region29
  $region28: #{_forward.9} parent=0 // pred_region
    _
  $region29: #{_forward.9} parent=0 // pred_fallthru
    _
  // Predicated region
  $region30: #{_forward.9} parent=0 // pred_check
    _
  $region31: #{_forward.9} parent=0 // pred_check_branch
    %66 = sbr.rel (0) target = $region33
  $region32: #{_forward.9} parent=0 // pred_region
    _
  $region33: #{_forward.9} parent=0 // pred_fallthru
    _

// kernel: _forward.8
$region0: #{_forward.8}
  #allocation0 [shape = 'u32[]', space=smem, size = 0x4, offset = 0x4, fixed_abs, tag = 'smem constant byte address 0x4 - core index']
  #allocation1 [shape = 'u32[144,128]{1,0:T(1,128)}', space=vmem, size = 0x12000, scoped, tag = 'internal scratch']
  %s0 = inlined_call_operand.vmem [shape: f32[4,2,128], index: 0, kind: input, shape index: {}]
  %s1 = inlined_call_operand.vmem [shape: f32[4,2,128], index: 1, kind: input, shape index: {}]
  %s2 = inlined_call_operand.vmem [shape: f32[32,128], index: 2, kind: input, shape index: {}]
  %s3 = inlined_call_operand.vmem [shape: f32[32,128], index: 3, kind: input, shape index: {}]
  %s4 = inlined_call_operand.vmem [shape: f32[2,2,32], index: 4, kind: input, shape index: {}]
  %s5 = inlined_call_operand.vmem [shape: f32[2,2,32], index: 5, kind: input, shape index: {}]
  %s6 = inlined_call_operand.vmem [shape: f32[2,32], index: 6, kind: output, shape index: {0}]
  %s7 = inlined_call_operand.vmem [shape: f32[2,32], index: 7, kind: output, shape index: {1}]
  %s8 = inlined_call_operand.hbm [shape: f32[2,2,32], index: 8, kind: output, shape index: {2}]
  %s9 = inlined_call_operand.hbm [shape: f32[2,2,32], index: 9, kind: output, shape index: {3}]
  %10 = xla_tuple %s6, %s7, %s8, %s9
  %s11 = sld [smem:[#allocation0]]
  $region65: #{_forward.8} parent=0
    _
  %s13 = ssub.s32 1, %s11
  %s14 = scalar_select 0, %s13, %s11
  $region1: #{_forward.8} parent=0
    #allocation2 [shape = 'u8[2048]{0}', space=vmem, size = 0x800, scoped, tag = 'output window, operand 2, single buffered']
    #allocation3 [shape = 's32[1]{0}', space=sflag, size = 0x4, scoped, tag = 'scoped memory for _forward.8']
    #allocation4 [shape = 'u8[2048]{0}', space=vmem, size = 0x800, scoped, tag = 'output window, operand 3, single buffered']
    #allocation5 [shape = 's32[1]{0}', space=sflag, size = 0x4, scoped, tag = 'scoped memory for _forward.8']
    %15 = vsyncpa [#allocation3], 0
    %16 = vsyncpa [#allocation5], 0
    // Predicated region
    $region2: #{_forward.8} parent=1 // pred_check
      _
    $region3: #{_forward.8} parent=1 // pred_check_branch
      %18 = sbr.rel (0) target = $region5
    $region4: #{_forward.8} parent=1 // pred_region
      _
    $region5: #{_forward.8} parent=1 // pred_fallthru
      _
    // Predicated region
    $region6: #{_forward.8} parent=1 // pred_check
      _
    $region7: #{_forward.8} parent=1 // pred_check_branch
      %20 = sbr.rel (0) target = $region9
    $region8: #{_forward.8} parent=1 // pred_region
      _
    $region9: #{_forward.8} parent=1 // pred_fallthru
      _
    // Predicated region
    $region10: #{_forward.8} parent=1 // pred_check
      _
    $region11: #{_forward.8} parent=1 // pred_check_branch
      %22 = sbr.rel (0) target = $region13
    $region12: #{_forward.8} parent=1 // pred_region
      _
    $region13: #{_forward.8} parent=1 // pred_fallthru
      _
    // Predicated region
    $region14: #{_forward.8} parent=1 // pred_check
      _
    $region15: #{_forward.8} parent=1 // pred_check_branch
      %24 = sbr.rel (0) target = $region17
    $region16: #{_forward.8} parent=1 // pred_region
      _
    $region17: #{_forward.8} parent=1 // pred_fallthru
      _
    // Predicated region
    $region18: #{_forward.8} parent=1 // pred_check
      _
    $region19: #{_forward.8} parent=1 // pred_check_branch
      %26 = sbr.rel (0) target = $region21
    $region20: #{_forward.8} parent=1 // pred_region
      _
    $region21: #{_forward.8} parent=1 // pred_fallthru
      _
    // Predicated region
    $region22: #{_forward.8} parent=1 // pred_check
      _
    $region23: #{_forward.8} parent=1 // pred_check_branch
      %28 = sbr.rel (0) target = $region25
    $region24: #{_forward.8} parent=1 // pred_region
      _
    $region25: #{_forward.8} parent=1 // pred_fallthru
      _
    %v29 = vld [vmem:[%s4] sm:$0x3]
    %v30 = vld [vmem:[%s4 + $0x2] sm:$0x3]
    %vm31 = vcmask 254976
    %32 = vst.msk [vmem:[#allocation2] sm:$0x3] %vm31, %v29
    %33 = vst.msk [vmem:[#allocation2 + $0x2] sm:$0x3] %vm31, %v30
    %v34 = vld [vmem:[%s5] sm:$0x3]
    %v35 = vld [vmem:[%s5 + $0x2] sm:$0x3]
    %36 = vst.msk [vmem:[#allocation4] sm:$0x3] %vm31, %v34
    %37 = vst.msk [vmem:[#allocation4 + $0x2] sm:$0x3] %vm31, %v35
    %38 = vst.msk [vmem:[%s6] sm:$0x3] %vm31, -inf
    %39 = vst.msk [vmem:[%s7] sm:$0x3] %vm31, -inf
    loop: start=0, step=1, limit=4
    $region26: #{_forward.8} parent=1 // loop_pre_header
      _
    $region27: #{_forward.8} parent=1 // loop_header
      %s41 = sphi 0, %s45
      %p42 = scmp.ge.s32.totalorder %s41, 4
    $region28: #{_forward.8} parent=1 // loop_header_branch
      %44 = sbr.rel (%p42) target = $region32
    $region29: #{_forward.8} parent=1 // loop_body
      %s46 = ssub.s32 3, %s41
      %s47 = smul.u32 %s41, 2
      %s48 = scalar_lea.vmem %s0, %s47
      %v49 = vld [vmem:[%s48] sm:$0x3]
      %v50 = vld [vmem:[#allocation2] sm:$0x3]
      %v51 = vld [vmem:[%s2] sm:$0xff]
      %v52 = vld [vmem:[%s2 + $0x8] sm:$0xff]
      %v53 = vld [vmem:[%s2 + $0x10] sm:$0xff]
      %v54 = vld [vmem:[%s2 + $0x18] sm:$0xff]
      %vm55 = vcmask 261120
      %v57 = vsel %vm55, %v50, 0
      %59 = vmatprep.subr.mxu0 0.0
      %60 = vmatpush1.msra.mxu0 %v51
      %61 = vmatprep.subr.mxu0 0.0
      %62 = vmatpush1.msra.mxu0 %v52
      %63 = vmatprep.subr.mxu0 0.0
      %64 = vmatpush1.msra.mxu0 %v53
      %65 = vmatprep.subr.mxu0 0.0
      %66 = vmatpush1.msra.mxu0 %v54
      %67 = vmatprep.subr.mxu0 0.0
      %68 = vmatpush1.msra.mxu0 0.0
      %69 = vmatprep.subr.mxu0 0.0
      %70 = vmatpush1.msra.mxu0 0.0
      %71 = vmatprep.subr.mxu0 0.0
      %72 = vmatpush1.msra.mxu0 0.0
      %73 = vmatprep.subr.mxu0 0.0
      %74 = vmatpush1.msra.mxu0 0.0
      %75 = vmatprep.subr.mxu0 0.0
      %76 = vmatpush1.msra.mxu0 0.0
      %77 = vmatprep.subr.mxu0 0.0
      %78 = vmatpush1.msra.mxu0 0.0
      %79 = vmatprep.subr.mxu0 0.0
      %80 = vmatpush1.msra.mxu0 0.0
      %81 = vmatprep.subr.mxu0 0.0
      %82 = vmatpush1.msra.mxu0 0.0
      %83 = vmatprep.subr.mxu0 0.0
      %84 = vmatpush1.msra.mxu0 0.0
      %85 = vmatprep.subr.mxu0 0.0
      %86 = vmatpush1.msra.mxu0 0.0
      %87 = vmatprep.subr.mxu0 0.0
      %88 = vmatpush1.msra.mxu0 0.0
      %89 = vmatprep.subr.mxu0 0.0
      %90 = vmatpush1.msra.mxu0 0.0
      %91 = vmatprep.subr.mxu0 0.0
      %92 = vmatpush1.msra.mxu0 0.0
      %93 = vmatprep.subr.mxu0 0.0
      %94 = vmatpush1.msra.mxu0 0.0
      %95 = vmatprep.subr.mxu0 0.0
      %96 = vmatpush1.msra.mxu0 0.0
      %97 = vmatprep.subr.mxu0 0.0
      %98 = vmatpush1.msra.mxu0 0.0
      %99 = vmatprep.subr.mxu0 0.0
      %100 = vmatpush1.msra.mxu0 0.0
      %101 = vmatprep.subr.mxu0 0.0
      %102 = vmatpush1.msra.mxu0 0.0
      %103 = vmatprep.subr.mxu0 0.0
      %104 = vmatpush1.msra.mxu0 0.0
      %105 = vmatprep.subr.mxu0 0.0
      %106 = vmatpush1.msra.mxu0 0.0
      %107 = vmatprep.subr.mxu0 0.0
      %108 = vmatpush1.msra.mxu0 0.0
      %109 = vmatprep.subr.mxu0 0.0
      %110 = vmatpush1.msra.mxu0 0.0
      %111 = vmatprep.subr.mxu0 0.0
      %112 = vmatpush1.msra.mxu0 0.0
      %113 = vmatprep.subr.mxu0 0.0
      %114 = vmatpush1.msra.mxu0 0.0
      %115 = vmatprep.subr.mxu0 0.0
      %116 = vmatpush1.msra.mxu0 0.0
      %117 = vmatprep.subr.mxu0 0.0
      %118 = vmatpush1.msra.mxu0 0.0
      %119 = vmatprep.subr.mxu0 0.0
      %120 = vmatpush1.msra.mxu0 0.0
      %121 = vmatprep.subr.mxu0 0.0
      %122 = vmatpush1.msra.mxu0 0.0
      %123 = vmatprep.mubr.f32.mxu0 0.0
      %124 = vmatmul.mubr.f32.gmra.mrb[0].mxu0 %v57
      %v125 = vpop.f32.mrb[0].mxu0
      %v126 = vadd.f32 0.0, %v125
      %v127 = vpop.f32.mrb[0].mxu0
      %128 = vdwg.mxu0
      %v129 = vadd.f32 %v49, %v126
      %s130 = smul.u32 %s46, 2
      %s131 = scalar_lea.vmem %s1, %s130
      %v132 = vld [vmem:[%s131] sm:$0x3]
      %s133 = scalar_lea.vmem [#allocation2], 2
      %v134 = vld [vmem:[%s133] sm:$0x3]
      %v135 = vld [vmem:[%s3] sm:$0xff]
      %v136 = vld [vmem:[%s3 + $0x8] sm:$0xff]
      %v137 = vld [vmem:[%s3 + $0x10] sm:$0xff]
      %v138 = vld [vmem:[%s3 + $0x18] sm:$0xff]
      %v140 = vsel %vm55, %v134, 0
      %142 = vmatprep.subr.mxu0 0.0
      %143 = vmatpush1.msra.mxu0 %v135
      %144 = vmatprep.subr.mxu0 0.0
      %145 = vmatpush1.msra.mxu0 %v136
      %146 = vmatprep.subr.mxu0 0.0
      %147 = vmatpush1.msra.mxu0 %v137
      %148 = vmatprep.subr.mxu0 0.0
      %149 = vmatpush1.msra.mxu0 %v138
      %150 = vmatprep.subr.mxu0 0.0
      %151 = vmatpush1.msra.mxu0 0.0
      %152 = vmatprep.subr.mxu0 0.0
      %153 = vmatpush1.msra.mxu0 0.0
      %154 = vmatprep.subr.mxu0 0.0
      %155 = vmatpush1.msra.mxu0 0.0
      %156 = vmatprep.subr.mxu0 0.0
      %157 = vmatpush1.msra.mxu0 0.0
      %158 = vmatprep.subr.mxu0 0.0
      %159 = vmatpush1.msra.mxu0 0.0
      %160 = vmatprep.subr.mxu0 0.0
      %161 = vmatpush1.msra.mxu0 0.0
      %162 = vmatprep.subr.mxu0 0.0
      %163 = vmatpush1.msra.mxu0 0.0
      %164 = vmatprep.subr.mxu0 0.0
      %165 = vmatpush1.msra.mxu0 0.0
      %166 = vmatprep.subr.mxu0 0.0
      %167 = vmatpush1.msra.mxu0 0.0
      %168 = vmatprep.subr.mxu0 0.0
      %169 = vmatpush1.msra.mxu0 0.0
      %170 = vmatprep.subr.mxu0 0.0
      %171 = vmatpush1.msra.mxu0 0.0
      %172 = vmatprep.subr.mxu0 0.0
      %173 = vmatpush1.msra.mxu0 0.0
      %174 = vmatprep.subr.mxu0 0.0
      %175 = vmatpush1.msra.mxu0 0.0
      %176 = vmatprep.subr.mxu0 0.0
      %177 = vmatpush1.msra.mxu0 0.0
      %178 = vmatprep.subr.mxu0 0.0
      %179 = vmatpush1.msra.mxu0 0.0
      %180 = vmatprep.subr.mxu0 0.0
      %181 = vmatpush1.msra.mxu0 0.0
      %182 = vmatprep.subr.mxu0 0.0
      %183 = vmatpush1.msra.mxu0 0.0
      %184 = vmatprep.subr.mxu0 0.0
      %185 = vmatpush1.msra.mxu0 0.0
      %186 = vmatprep.subr.mxu0 0.0
      %187 = vmatpush1.msra.mxu0 0.0
      %188 = vmatprep.subr.mxu0 0.0
      %189 = vmatpush1.msra.mxu0 0.0
      %190 = vmatprep.subr.mxu0 0.0
      %191 = vmatpush1.msra.mxu0 0.0
      %192 = vmatprep.subr.mxu0 0.0
      %193 = vmatpush1.msra.mxu0 0.0
      %194 = vmatprep.subr.mxu0 0.0
      %195 = vmatpush1.msra.mxu0 0.0
      %196 = vmatprep.subr.mxu0 0.0
      %197 = vmatpush1.msra.mxu0 0.0
      %198 = vmatprep.subr.mxu0 0.0
      %199 = vmatpush1.msra.mxu0 0.0
      %200 = vmatprep.subr.mxu0 0.0
      %201 = vmatpush1.msra.mxu0 0.0
      %202 = vmatprep.subr.mxu0 0.0
      %203 = vmatpush1.msra.mxu0 0.0
      %204 = vmatprep.subr.mxu0 0.0
      %205 = vmatpush1.msra.mxu0 0.0
      %206 = vmatprep.mubr.f32.mxu0 0.0
      %207 = vmatmul.mubr.f32.gmra.mrb[0].mxu0 %v140
      %v208 = vpop.f32.mrb[0].mxu0
      %v209 = vadd.f32 0.0, %v208
      %v210 = vpop.f32.mrb[0].mxu0
      %211 = vdwg.mxu0
      %v212 = vadd.f32 %v132, %v209
      %v213 = vld [vmem:[#allocation4] sm:$0x3]
      %v214 = vxor.u32 %v129, 2147483648
      %v215 = vmul.f32 %v214, 1.442695
      %v216 = vpow.pop %v215
      %v217 = vadd.f32 %v216, 1.0
      %v218 = vrcp.pop %v217
      %v219 = vmul.f32 1.0, %v218
      %v220 = vtanh.pop %v129
      %222 = vrot.lane.b32.xlu0 %v213, 32
      %v223 = vpop.permute.xlu0 %222
      %v225 = vmul.f32 %v219, %v223
      %227 = vrot.lane.b32.xlu0 %v220, 64
      %v228 = vpop.permute.xlu0 %227
      %v230 = vmul.f32 %v219, %v228
      %232 = vrot.lane.b32.xlu0 %v230, 32
      %v233 = vpop.permute.xlu0 %232
      %v235 = vadd.f32 %v225, %v233
      %v236 = vtanh.pop %v235
      %238 = vrot.lane.b32.xlu0 %v236, 64
      %v239 = vpop.permute.xlu0 %238
      %v241 = vmul.f32 %v219, %v239
      %s242 = scalar_lea.vmem [#allocation4], 2
      %v243 = vld [vmem:[%s242] sm:$0x3]
      %v244 = vxor.u32 %v212, 2147483648
      %v245 = vmul.f32 %v244, 1.442695
      %v246 = vpow.pop %v245
      %v247 = vadd.f32 %v246, 1.0
      %v248 = vrcp.pop %v247
      %v249 = vmul.f32 1.0, %v248
      %v250 = vtanh.pop %v212
      %252 = vrot.lane.b32.xlu0 %v243, 32
      %v253 = vpop.permute.xlu0 %252
      %v255 = vmul.f32 %v249, %v253
      %257 = vrot.lane.b32.xlu0 %v250, 64
      %v258 = vpop.permute.xlu0 %257
      %v260 = vmul.f32 %v249, %v258
      %262 = vrot.lane.b32.xlu0 %v260, 32
      %v263 = vpop.permute.xlu0 %262
      %v265 = vadd.f32 %v255, %v263
      %v266 = vtanh.pop %v265
      %268 = vrot.lane.b32.xlu0 %v266, 64
      %v269 = vpop.permute.xlu0 %268
      %v271 = vmul.f32 %v249, %v269
      %273 = vrot.lane.b32.xlu0 %v241, 32
      %v274 = vpop.permute.xlu0 %273
      %276 = vst.msk [vmem:[#allocation2] sm:$0x3] %vm31, %v274
      %278 = vrot.lane.b32.xlu0 %v235, 96
      %v279 = vpop.permute.xlu0 %278
      %281 = vst.msk [vmem:[#allocation4] sm:$0x3] %vm31, %v279
      %283 = vrot.lane.b32.xlu0 %v271, 32
      %v284 = vpop.permute.xlu0 %283
      %286 = vst.msk [vmem:[%s133] sm:$0x3] %vm31, %v284
      %288 = vrot.lane.b32.xlu0 %v265, 96
      %v289 = vpop.permute.xlu0 %288
      %291 = vst.msk [vmem:[%s242] sm:$0x3] %vm31, %v289
      %v292 = vld [vmem:[%s6] sm:$0x3]
      %v293 = vmax.f32 %v292, %v274
      %294 = vst.msk [vmem:[%s6] sm:$0x3] %vm31, %v293
      %v295 = vld [vmem:[%s7] sm:$0x3]
      %v296 = vmax.f32 %v295, %v284
      %297 = vst.msk [vmem:[%s7] sm:$0x3] %vm31, %v296
    $region30: #{_forward.8} parent=1 // loop_footer
      %s45 = sadd.s32 1, %s41
    $region31: #{_forward.8} parent=1 // loop_footer_branch
      %40 = sbr.rel target = $region27
    $region32: #{_forward.8} parent=1 // loop_exit
      _
    // Predicated region
    $region33: #{_forward.8} parent=1 // pred_check
      _
    $region34: #{_forward.8} parent=1 // pred_check_branch
      %299 = sbr.rel (0) target = $region36
    $region35: #{_forward.8} parent=1 // pred_region
      _
    $region36: #{_forward.8} parent=1 // pred_fallthru
      _
    // Predicated region
    $region37: #{_forward.8} parent=1 // pred_check
      _
    $region38: #{_forward.8} parent=1 // pred_check_branch
      %301 = sbr.rel (0) target = $region40
    $region39: #{_forward.8} parent=1 // pred_region
      _
    $region40: #{_forward.8} parent=1 // pred_fallthru
      _
    // Predicated region
    $region41: #{_forward.8} parent=1 // pred_check
      _
    $region42: #{_forward.8} parent=1 // pred_check_branch
      %303 = sbr.rel (0) target = $region44
    $region43: #{_forward.8} parent=1 // pred_region
      %s305 = ssub.s32 64, 64
      %306 = vsyncadd [#allocation3], %s305
      %s307 = sshll.u32 [#allocation2], 4
      %s308 = int_to_ptr.vmem [resolvable:$true] %s307
      %313 = dma.vmem_to_hbm [thread:$0]  %s308, 64, %s8, [#allocation3], 32, 32, 2
    $region44: #{_forward.8} parent=1 // pred_fallthru
      _
    // Predicated region
    $region45: #{_forward.8} parent=1 // pred_check
      _
    $region46: #{_forward.8} parent=1 // pred_check_branch
      %315 = sbr.rel (0) target = $region48
    $region47: #{_forward.8} parent=1 // pred_region
      %s317 = ssub.s32 64, 64
      %318 = vsyncadd [#allocation5], %s317
      %s319 = sshll.u32 [#allocation4], 4
      %s320 = int_to_ptr.vmem [resolvable:$true] %s319
      %325 = dma.vmem_to_hbm [thread:$0]  %s320, 64, %s9, [#allocation5], 32, 32, 2
    $region48: #{_forward.8} parent=1 // pred_fallthru
      _
    // Predicated region
    $region49: #{_forward.8} parent=1 // pred_check
      _
    $region50: #{_forward.8} parent=1 // pred_check_branch
      %327 = sbr.rel (0) target = $region52
    $region51: #{_forward.8} parent=1 // pred_region
      _
    $region52: #{_forward.8} parent=1 // pred_fallthru
      _
    // Predicated region
    $region53: #{_forward.8} parent=1 // pred_check
      _
    $region54: #{_forward.8} parent=1 // pred_check_branch
      %329 = sbr.rel (0) target = $region56
    $region55: #{_forward.8} parent=1 // pred_region
      _
    $region56: #{_forward.8} parent=1 // pred_fallthru
      _
    // Predicated region
    $region57: #{_forward.8} parent=1 // pred_check
      _
    $region58: #{_forward.8} parent=1 // pred_check_branch
      %331 = sbr.rel (0) target = $region60
    $region59: #{_forward.8} parent=1 // pred_region
      %332 = dma.done [#allocation3], 64
    $region60: #{_forward.8} parent=1 // pred_fallthru
      _
    // Predicated region
    $region61: #{_forward.8} parent=1 // pred_check
      _
    $region62: #{_forward.8} parent=1 // pred_check_branch
      %334 = sbr.rel (0) target = $region64
    $region63: #{_forward.8} parent=1 // pred_region
      %335 = dma.done [#allocation5], 64
    $region64: #{_forward.8} parent=1 // pred_fallthru
      _
    %336 = vsyncpa [#allocation3], 1
    %337 = vsyncpa [#allocation5], 1

</llo_original>
